<compile_context>
chip_gen: v7x
topology: tpu7x:2x2x1
jax: 0.10.0
libtpu: 0.0.40
codegen_flags: <defaults>
</compile_context>

<pallas_src>
import functools
import math

import jax
import jax.numpy as jnp
from jax.experimental import pallas as pl
from jax.experimental.pallas import tpu as pltpu


def self_attention_kernel(x_ref, wqkv_ref, bqkv_ref, wo_ref, bo_ref, o_ref, *,
                          num_heads, head_dim, block_b, eps, mxu_dtype):
    H, D, Bt = num_heads, head_dim, block_b
    S, F = x_ref.shape[1], x_ref.shape[2]
    R = Bt * S            # merged (batch, seq) row axis for the projections

    # Single cast of the activations at kernel entry; weights arrive from the
    # host already in mxu_dtype.
    x2 = x_ref[...].reshape(R, F).astype(mxu_dtype)

    # Fused full-width Q/K/V projection: (R, F) @ (F, 3F) on the MXU with f32
    # accumulation and f32 bias add.  Column layout: [Q | K | V], each block
    # head-major (head h -> columns h*D : (h+1)*D), with the 1/sqrt(D)
    # attention scale already folded into the Q columns.
    qkv = jnp.dot(x2, wqkv_ref[...],
                  preferred_element_type=jnp.float32) + bqkv_ref[...]  # (R, 3F) f32
    qkv_m = qkv.astype(mxu_dtype)      # one cast; per-head slices read from this

    wo = wo_ref[...]                   # (F, F) mxu_dtype, rows head-major

    # Per-head attention, accumulating the output projection into one (R, F)
    # f32 accumulator: no (H, R, F) partials, no replicated x or weights.
    # H is a compile-time constant -> static lane slices, unrolled loop.
    acc = jnp.zeros((R, F), jnp.float32)
    for h in range(H):
        c0 = h * D
        q = qkv_m[:, c0:c0 + D].reshape(Bt, S, D)              # pre-scaled Q
        k = qkv_m[:, F + c0:F + c0 + D].reshape(Bt, S, D)
        v = qkv_m[:, 2 * F + c0:2 * F + c0 + D].reshape(Bt, S, D)

        scores = jnp.einsum("bqd,bkd->bqk", q, k,
                            preferred_element_type=jnp.float32)  # (Bt, S, S) f32
        m = jnp.max(scores, axis=-1, keepdims=True)
        p = jnp.exp(scores - m)
        attn = p * pl.reciprocal(jnp.sum(p, axis=-1, keepdims=True), approx=True)
        # (eval mode: dropout on attn is the identity)

        ctx = jnp.einsum("bqk,bkd->bqd", attn.astype(mxu_dtype), v,
                         preferred_element_type=jnp.float32)     # (Bt, S, D) f32

        acc = acc + jnp.dot(ctx.reshape(R, D).astype(mxu_dtype),
                            wo[c0:c0 + D, :],
                            preferred_element_type=jnp.float32)  # (R, F) f32

    out = jnp.maximum(acc + bo_ref[...], 0.0)                    # bias + ReLU, f32

    # LayerNorm over the feature axis (no affine, eps=1e-5, population
    # variance), matching F.layer_norm(out, [in_features]); kept in f32.
    mean = jnp.mean(out, axis=-1, keepdims=True)
    centered = out - mean
    var = jnp.mean(centered * centered, axis=-1, keepdims=True)
    o_ref[...] = (centered * jax.lax.rsqrt(var + eps)).reshape(Bt, S, F) \
        .astype(o_ref.dtype)


def self_attention(x, wq, bq, wk, bk, wv, bv, wo, bo, *, num_heads,
                   block_b=None, mxu_dtype=jnp.bfloat16,
                   vmem_limit_bytes=48 * 1024 * 1024):
    """Pallas self-attention (eval mode).  Linear weights are
    (in_features, out_features), i.e. y = x @ W + b (transpose of nn.Linear's
    storage, same math).  Only the MXU operands use `mxu_dtype` (bf16
    default); accumulation, softmax and LayerNorm stay f32.  Pass
    mxu_dtype=jnp.float32 for exact-f32 numerics."""
    B, S, F = x.shape
    assert F % num_heads == 0, "in_features must be divisible by num_heads"
    D = F // num_heads

    if block_b is None:
        # Aim for >= 4 grid steps (>= 2 per TensorCore on v7x) so the
        # "parallel" batch axis feeds both cores and the pipeline overlaps
        # DMA with compute, while keeping blocks as large as possible.
        block_b = max(1, B // 4)
        while B % block_b:
            block_b -= 1
    assert B % block_b == 0, "block_b must divide the batch size"
    num_blocks = B // block_b

    # Host-side pre-layout (free, tiny tensors):
    #   w_qkv = [Wq*scale | Wk | Wv]  (F, 3F); columns inside each block are
    #   already head-major, and the 1/sqrt(D) scale is folded into Q.
    scale = 1.0 / math.sqrt(D)
    w_qkv = jnp.concatenate([wq * scale, wk, wv], axis=1)          # (F, 3F)
    b_qkv = jnp.concatenate([bq.reshape(1, F) * scale,
                             bk.reshape(1, F),
                             bv.reshape(1, F)], axis=1)            # (1, 3F) f32
    bo_r = bo.reshape(1, F)                                        # (1, F)  f32

    # Only MXU operands are shipped in mxu_dtype (half the weight HBM->VMEM
    # bytes for bf16); biases stay f32.
    w_qkv = w_qkv.astype(mxu_dtype)
    wo_m = wo.astype(mxu_dtype)

    kernel = functools.partial(
        self_attention_kernel,
        num_heads=num_heads, head_dim=D, block_b=block_b, eps=1e-5,
        mxu_dtype=mxu_dtype)

    const2 = lambda i: (0, 0)

    # NOTE: at the demo shape the output's last dim (F=32) is below the
    # 128-lane width, so stores are masked vst; for production shapes make F
    # (and 3F) a multiple of 128 for lane-dense unmasked stores.  Re-laying
    # the tiny demo output to (block_b, S*F) would trade the masked store for
    # an in-kernel relayout -- a net loss at this size.
    return pl.pallas_call(
        kernel,
        out_shape=jax.ShapeDtypeStruct((B, S, F), jnp.float32),
        grid=(num_blocks,),
        in_specs=[
            pl.BlockSpec((block_b, S, F), lambda i: (i, 0, 0)),     # x
            pl.BlockSpec((F, 3 * F), const2),                       # fused QKV W
            pl.BlockSpec((1, 3 * F), const2),                       # fused QKV b
            pl.BlockSpec((F, F), const2),                           # out-proj W
            pl.BlockSpec((1, F), const2),                           # out-proj b
        ],
        out_specs=pl.BlockSpec((block_b, S, F), lambda i: (i, 0, 0)),
        compiler_params=pltpu.CompilerParams(
            dimension_semantics=("parallel",),
            # Explicit scoped-VMEM budget: below v7x's 64 MiB physical, above
            # v5e's 16 MiB default scoped limit so larger batch blocks fit.
            vmem_limit_bytes=vmem_limit_bytes),
    )(x, w_qkv, b_qkv, wo_m, bo_r)


def self_attention_ref(x, wq, bq, wk, bk, wv, bv, wo, bo, *, num_heads):
    """Pure-JAX reference (mirrors the PyTorch module, eval mode)."""
    B, S, F = x.shape
    D = F // num_heads
    q = (x @ wq + bq).reshape(B, S, num_heads, D).transpose(0, 2, 1, 3)
    k = (x @ wk + bk).reshape(B, S, num_heads, D).transpose(0, 2, 1, 3)
    v = (x @ wv + bv).reshape(B, S, num_heads, D).transpose(0, 2, 1, 3)
    scores = jnp.einsum("bhqd,bhkd->bhqk", q, k) / math.sqrt(D)
    attn = jax.nn.softmax(scores, axis=-1)
    ctx = jnp.einsum("bhqk,bhkd->bhqd", attn, v)
    ctx = ctx.transpose(0, 2, 1, 3).reshape(B, S, F)
    out = jnp.maximum(ctx @ wo + bo, 0.0)
    mean = out.mean(-1, keepdims=True)
    var = ((out - mean) ** 2).mean(-1, keepdims=True)
    return (out - mean) * jax.lax.rsqrt(var + 1e-5)


def init_params(key, in_features):
    ks = jax.random.split(key, 8)
    scale = 1.0 / math.sqrt(in_features)
    wq = jax.random.normal(ks[0], (in_features, in_features), jnp.float32) * scale
    bq = jax.random.normal(ks[1], (1, in_features), jnp.float32) * 0.01
    wk = jax.random.normal(ks[2], (in_features, in_features), jnp.float32) * scale
    bk = jax.random.normal(ks[3], (1, in_features), jnp.float32) * 0.01
    wv = jax.random.normal(ks[4], (in_features, in_features), jnp.float32) * scale
    bv = jax.random.normal(ks[5], (1, in_features), jnp.float32) * 0.01
    wo = jax.random.normal(ks[6], (in_features, in_features), jnp.float32) * scale
    bo = jax.random.normal(ks[7], (1, in_features), jnp.float32) * 0.01
    return wq, bq, wk, bk, wv, bv, wo, bo


if __name__ == "__main__":
    B, S, F = 2, 8, 32
    NUM_HEADS = 8

    key = jax.random.PRNGKey(0)
    kx, kp = jax.random.split(key)
    x = jax.random.normal(kx, (B, S, F), jnp.float32)
    params = init_params(kp, F)

    ref = self_attention_ref(x, *params, num_heads=NUM_HEADS)

    # Exact-f32 MXU path: tight check against the pure-JAX reference (also
    # validates the approx softmax reciprocal stays well inside tolerance).
    out_f32 = self_attention(x, *params, num_heads=NUM_HEADS,
                             mxu_dtype=jnp.float32)
    jax.block_until_ready(out_f32)
    assert out_f32.shape == (B, S, F), out_f32.shape
    err_f32 = float(jnp.max(jnp.abs(out_f32 - ref)))
    assert err_f32 < 2e-2, f"f32 kernel/reference mismatch: max abs err = {err_f32}"

    # Default bf16-MXU path (f32 accumulation / softmax / LayerNorm): looser
    # sanity bound -- bf16 rounding through three matmul stages is amplified
    # by the final LayerNorm; exact numerics are covered by the f32 check.
    out_bf16 = self_attention(x, *params, num_heads=NUM_HEADS)
    jax.block_until_ready(out_bf16)
    assert out_bf16.shape == (B, S, F), out_bf16.shape
    assert bool(jnp.all(jnp.isfinite(out_bf16)))
    err_bf16 = float(jnp.max(jnp.abs(out_bf16 - ref)))
    assert err_bf16 < 2e-1, f"bf16 kernel/reference mismatch: max abs err = {err_bf16}"

    print("KERNEL_OK")
</pallas_src>

<mosaic_0001>
module attributes {stable_mosaic.version = 11 : i64} {
  func.func @self_attention_kernel(%arg0: i32, %arg1: memref<1x8x32xf32, #tpu.memory_space<vmem>>, %arg2: memref<32x96xf32, #tpu.memory_space<vmem>>, %arg3: memref<1x96xf32, #tpu.memory_space<vmem>>, %arg4: memref<32x32xf32, #tpu.memory_space<vmem>>, %arg5: memref<1x32xf32, #tpu.memory_space<vmem>>, %arg6: memref<1x8x32xf32, #tpu.memory_space<vmem>>) attributes {dimension_semantics = [#tpu.dimension_semantics<parallel>], iteration_bounds = array<i64: 2>, scalar_prefetch = 0 : i64, scratch_operands = 0 : i64, tpu.core_type = #tpu.core_type<tc>, window_params = [{transform_indices = @transform_0, window_bounds = array<i64: 1, 8, 32>}, {pipeline_mode = #tpu.pipeline_mode<synchronous>, transform_indices = @transform_1, window_bounds = array<i64: 32, 96>}, {pipeline_mode = #tpu.pipeline_mode<synchronous>, transform_indices = @transform_2, window_bounds = array<i64: 1, 96>}, {pipeline_mode = #tpu.pipeline_mode<synchronous>, transform_indices = @transform_3, window_bounds = array<i64: 32, 32>}, {pipeline_mode = #tpu.pipeline_mode<synchronous>, transform_indices = @transform_4, window_bounds = array<i64: 1, 32>}, {transform_indices = @transform_5, window_bounds = array<i64: 1, 8, 32>}]} {
    %c0 = arith.constant 0 : index
    %c0_0 = arith.constant 0 : index
    %c0_1 = arith.constant 0 : index
    %0 = vector.load %arg1[%c0, %c0_0, %c0_1] : memref<1x8x32xf32, #tpu.memory_space<vmem>>, vector<1x8x32xf32>
    %1 = vector.shape_cast %0 : vector<1x8x32xf32> to vector<8x32xf32>
    %c0_2 = arith.constant 0 : index
    %c0_3 = arith.constant 0 : index
    %2 = vector.load %arg2[%c0_2, %c0_3] : memref<32x96xf32, #tpu.memory_space<vmem>>, vector<32x96xf32>
    %cst = arith.constant dense<0.000000e+00> : vector<8x96xf32>
    %3 = tpu.matmul %1, %2, %cst {dimension_numbers = #tpu.dot_dimension_numbers<[1], [0], [0], [1], [0, 0, 1, 1], [], []>} : vector<8x32xf32>, vector<32x96xf32>, vector<8x96xf32> -> vector<8x96xf32>
    %c0_4 = arith.constant 0 : index
    %c0_5 = arith.constant 0 : index
    %4 = vector.load %arg3[%c0_4, %c0_5] : memref<1x96xf32, #tpu.memory_space<vmem>>, vector<1x96xf32>
    %5 = vector.broadcast %4 : vector<1x96xf32> to vector<8x96xf32>
    %6 = arith.addf %3, %5 : vector<8x96xf32>
    %c0_6 = arith.constant 0 : index
    %c0_7 = arith.constant 0 : index
    %7 = vector.load %arg4[%c0_6, %c0_7] : memref<32x32xf32, #tpu.memory_space<vmem>>, vector<32x32xf32>
    %cst_8 = arith.constant 0.000000e+00 : f32
    %8 = vector.broadcast %cst_8 : f32 to vector<8x32xf32>
    %9 = vector.extract_strided_slice %6 {offsets = [0, 0], sizes = [8, 4], strides = [1, 1]} : vector<8x96xf32> to vector<8x4xf32>
    %10 = vector.shape_cast %9 : vector<8x4xf32> to vector<1x8x4xf32>
    %11 = vector.extract_strided_slice %6 {offsets = [0, 32], sizes = [8, 4], strides = [1, 1]} : vector<8x96xf32> to vector<8x4xf32>
    %12 = vector.shape_cast %11 : vector<8x4xf32> to vector<1x8x4xf32>
    %13 = vector.extract_strided_slice %6 {offsets = [0, 64], sizes = [8, 4], strides = [1, 1]} : vector<8x96xf32> to vector<8x4xf32>
    %14 = vector.shape_cast %13 : vector<8x4xf32> to vector<1x8x4xf32>
    "tpu.trace_start"() <{level = 10 : i32, message = "bqd,bkd->bqk"}> : () -> ()
    %cst_9 = arith.constant dense<0.000000e+00> : vector<1x8x8xf32>
    %15 = tpu.matmul %10, %12, %cst_9 {dimension_numbers = #tpu.dot_dimension_numbers<[2], [2], [1], [1], [0, 0, 0, 1, 1, 1], [0], [0]>} : vector<1x8x4xf32>, vector<1x8x4xf32>, vector<1x8x8xf32> -> vector<1x8x8xf32>
    "tpu.trace_stop"() : () -> ()
    %cst_10 = arith.constant dense<0xFF800000> : vector<1x8xf32>
    %16 = vector.multi_reduction <maximumf>, %15, %cst_10 [2] : vector<1x8x8xf32> to vector<1x8xf32>
    %17 = vector.shape_cast %16 : vector<1x8xf32> to vector<1x8x1xf32>
    %18 = vector.broadcast %17 : vector<1x8x1xf32> to vector<1x8x8xf32>
    %19 = arith.subf %15, %18 : vector<1x8x8xf32>
    %20 = math.exp %19 : vector<1x8x8xf32>
    %cst_11 = arith.constant dense<0.000000e+00> : vector<1x8xf32>
    %21 = vector.multi_reduction <add>, %20, %cst_11 [2] : vector<1x8x8xf32> to vector<1x8xf32>
    %22 = vector.shape_cast %21 : vector<1x8xf32> to vector<1x8x1xf32>
    %23 = tpu.reciprocal %22 {approx = true} : vector<1x8x1xf32> -> vector<1x8x1xf32>
    %24 = vector.broadcast %23 : vector<1x8x1xf32> to vector<1x8x8xf32>
    %25 = arith.mulf %20, %24 : vector<1x8x8xf32>
    "tpu.trace_start"() <{level = 10 : i32, message = "bqk,bkd->bqd"}> : () -> ()
    %cst_12 = arith.constant dense<0.000000e+00> : vector<1x8x4xf32>
    %26 = tpu.matmul %25, %14, %cst_12 {dimension_numbers = #tpu.dot_dimension_numbers<[2], [1], [1], [2], [0, 0, 0, 1, 1, 2], [0], [0]>} : vector<1x8x8xf32>, vector<1x8x4xf32>, vector<1x8x4xf32> -> vector<1x8x4xf32>
    "tpu.trace_stop"() : () -> ()
    %27 = vector.shape_cast %26 : vector<1x8x4xf32> to vector<8x4xf32>
    %28 = vector.extract_strided_slice %7 {offsets = [0, 0], sizes = [4, 32], strides = [1, 1]} : vector<32x32xf32> to vector<4x32xf32>
    %cst_13 = arith.constant dense<0.000000e+00> : vector<8x32xf32>
    %29 = tpu.matmul %27, %28, %cst_13 {dimension_numbers = #tpu.dot_dimension_numbers<[1], [0], [0], [1], [0, 0, 1, 1], [], []>} : vector<8x4xf32>, vector<4x32xf32>, vector<8x32xf32> -> vector<8x32xf32>
    %30 = arith.addf %8, %29 : vector<8x32xf32>
    %31 = vector.extract_strided_slice %6 {offsets = [0, 4], sizes = [8, 4], strides = [1, 1]} : vector<8x96xf32> to vector<8x4xf32>
    %32 = vector.shape_cast %31 : vector<8x4xf32> to vector<1x8x4xf32>
    %33 = vector.extract_strided_slice %6 {offsets = [0, 36], sizes = [8, 4], strides = [1, 1]} : vector<8x96xf32> to vector<8x4xf32>
    %34 = vector.shape_cast %33 : vector<8x4xf32> to vector<1x8x4xf32>
    %35 = vector.extract_strided_slice %6 {offsets = [0, 68], sizes = [8, 4], strides = [1, 1]} : vector<8x96xf32> to vector<8x4xf32>
    %36 = vector.shape_cast %35 : vector<8x4xf32> to vector<1x8x4xf32>
    "tpu.trace_start"() <{level = 10 : i32, message = "bqd,bkd->bqk"}> : () -> ()
    %cst_14 = arith.constant dense<0.000000e+00> : vector<1x8x8xf32>
    %37 = tpu.matmul %32, %34, %cst_14 {dimension_numbers = #tpu.dot_dimension_numbers<[2], [2], [1], [1], [0, 0, 0, 1, 1, 1], [0], [0]>} : vector<1x8x4xf32>, vector<1x8x4xf32>, vector<1x8x8xf32> -> vector<1x8x8xf32>
    "tpu.trace_stop"() : () -> ()
    %cst_15 = arith.constant dense<0xFF800000> : vector<1x8xf32>
    %38 = vector.multi_reduction <maximumf>, %37, %cst_15 [2] : vector<1x8x8xf32> to vector<1x8xf32>
    %39 = vector.shape_cast %38 : vector<1x8xf32> to vector<1x8x1xf32>
    %40 = vector.broadcast %39 : vector<1x8x1xf32> to vector<1x8x8xf32>
    %41 = arith.subf %37, %40 : vector<1x8x8xf32>
    %42 = math.exp %41 : vector<1x8x8xf32>
    %cst_16 = arith.constant dense<0.000000e+00> : vector<1x8xf32>
    %43 = vector.multi_reduction <add>, %42, %cst_16 [2] : vector<1x8x8xf32> to vector<1x8xf32>
    %44 = vector.shape_cast %43 : vector<1x8xf32> to vector<1x8x1xf32>
    %45 = tpu.reciprocal %44 {approx = true} : vector<1x8x1xf32> -> vector<1x8x1xf32>
    %46 = vector.broadcast %45 : vector<1x8x1xf32> to vector<1x8x8xf32>
    %47 = arith.mulf %42, %46 : vector<1x8x8xf32>
    "tpu.trace_start"() <{level = 10 : i32, message = "bqk,bkd->bqd"}> : () -> ()
    %cst_17 = arith.constant dense<0.000000e+00> : vector<1x8x4xf32>
    %48 = tpu.matmul %47, %36, %cst_17 {dimension_numbers = #tpu.dot_dimension_numbers<[2], [1], [1], [2], [0, 0, 0, 1, 1, 2], [0], [0]>} : vector<1x8x8xf32>, vector<1x8x4xf32>, vector<1x8x4xf32> -> vector<1x8x4xf32>
    "tpu.trace_stop"() : () -> ()
    %49 = vector.shape_cast %48 : vector<1x8x4xf32> to vector<8x4xf32>
    %50 = vector.extract_strided_slice %7 {offsets = [4, 0], sizes = [4, 32], strides = [1, 1]} : vector<32x32xf32> to vector<4x32xf32>
    %cst_18 = arith.constant dense<0.000000e+00> : vector<8x32xf32>
    %51 = tpu.matmul %49, %50, %cst_18 {dimension_numbers = #tpu.dot_dimension_numbers<[1], [0], [0], [1], [0, 0, 1, 1], [], []>} : vector<8x4xf32>, vector<4x32xf32>, vector<8x32xf32> -> vector<8x32xf32>
    %52 = arith.addf %30, %51 : vector<8x32xf32>
    %53 = vector.extract_strided_slice %6 {offsets = [0, 8], sizes = [8, 4], strides = [1, 1]} : vector<8x96xf32> to vector<8x4xf32>
    %54 = vector.shape_cast %53 : vector<8x4xf32> to vector<1x8x4xf32>
    %55 = vector.extract_strided_slice %6 {offsets = [0, 40], sizes = [8, 4], strides = [1, 1]} : vector<8x96xf32> to vector<8x4xf32>
    %56 = vector.shape_cast %55 : vector<8x4xf32> to vector<1x8x4xf32>
    %57 = vector.extract_strided_slice %6 {offsets = [0, 72], sizes = [8, 4], strides = [1, 1]} : vector<8x96xf32> to vector<8x4xf32>
    %58 = vector.shape_cast %57 : vector<8x4xf32> to vector<1x8x4xf32>
    "tpu.trace_start"() <{level = 10 : i32, message = "bqd,bkd->bqk"}> : () -> ()
    %cst_19 = arith.constant dense<0.000000e+00> : vector<1x8x8xf32>
    %59 = tpu.matmul %54, %56, %cst_19 {dimension_numbers = #tpu.dot_dimension_numbers<[2], [2], [1], [1], [0, 0, 0, 1, 1, 1], [0], [0]>} : vector<1x8x4xf32>, vector<1x8x4xf32>, vector<1x8x8xf32> -> vector<1x8x8xf32>
    "tpu.trace_stop"() : () -> ()
    %cst_20 = arith.constant dense<0xFF800000> : vector<1x8xf32>
    %60 = vector.multi_reduction <maximumf>, %59, %cst_20 [2] : vector<1x8x8xf32> to vector<1x8xf32>
    %61 = vector.shape_cast %60 : vector<1x8xf32> to vector<1x8x1xf32>
    %62 = vector.broadcast %61 : vector<1x8x1xf32> to vector<1x8x8xf32>
    %63 = arith.subf %59, %62 : vector<1x8x8xf32>
    %64 = math.exp %63 : vector<1x8x8xf32>
    %cst_21 = arith.constant dense<0.000000e+00> : vector<1x8xf32>
    %65 = vector.multi_reduction <add>, %64, %cst_21 [2] : vector<1x8x8xf32> to vector<1x8xf32>
    %66 = vector.shape_cast %65 : vector<1x8xf32> to vector<1x8x1xf32>
    %67 = tpu.reciprocal %66 {approx = true} : vector<1x8x1xf32> -> vector<1x8x1xf32>
    %68 = vector.broadcast %67 : vector<1x8x1xf32> to vector<1x8x8xf32>
    %69 = arith.mulf %64, %68 : vector<1x8x8xf32>
    "tpu.trace_start"() <{level = 10 : i32, message = "bqk,bkd->bqd"}> : () -> ()
    %cst_22 = arith.constant dense<0.000000e+00> : vector<1x8x4xf32>
    %70 = tpu.matmul %69, %58, %cst_22 {dimension_numbers = #tpu.dot_dimension_numbers<[2], [1], [1], [2], [0, 0, 0, 1, 1, 2], [0], [0]>} : vector<1x8x8xf32>, vector<1x8x4xf32>, vector<1x8x4xf32> -> vector<1x8x4xf32>
    "tpu.trace_stop"() : () -> ()
    %71 = vector.shape_cast %70 : vector<1x8x4xf32> to vector<8x4xf32>
    %72 = vector.extract_strided_slice %7 {offsets = [8, 0], sizes = [4, 32], strides = [1, 1]} : vector<32x32xf32> to vector<4x32xf32>
    %cst_23 = arith.constant dense<0.000000e+00> : vector<8x32xf32>
    %73 = tpu.matmul %71, %72, %cst_23 {dimension_numbers = #tpu.dot_dimension_numbers<[1], [0], [0], [1], [0, 0, 1, 1], [], []>} : vector<8x4xf32>, vector<4x32xf32>, vector<8x32xf32> -> vector<8x32xf32>
    %74 = arith.addf %52, %73 : vector<8x32xf32>
    %75 = vector.extract_strided_slice %6 {offsets = [0, 12], sizes = [8, 4], strides = [1, 1]} : vector<8x96xf32> to vector<8x4xf32>
    %76 = vector.shape_cast %75 : vector<8x4xf32> to vector<1x8x4xf32>
    %77 = vector.extract_strided_slice %6 {offsets = [0, 44], sizes = [8, 4], strides = [1, 1]} : vector<8x96xf32> to vector<8x4xf32>
    %78 = vector.shape_cast %77 : vector<8x4xf32> to vector<1x8x4xf32>
    %79 = vector.extract_strided_slice %6 {offsets = [0, 76], sizes = [8, 4], strides = [1, 1]} : vector<8x96xf32> to vector<8x4xf32>
    %80 = vector.shape_cast %79 : vector<8x4xf32> to vector<1x8x4xf32>
    "tpu.trace_start"() <{level = 10 : i32, message = "bqd,bkd->bqk"}> : () -> ()
    %cst_24 = arith.constant dense<0.000000e+00> : vector<1x8x8xf32>
    %81 = tpu.matmul %76, %78, %cst_24 {dimension_numbers = #tpu.dot_dimension_numbers<[2], [2], [1], [1], [0, 0, 0, 1, 1, 1], [0], [0]>} : vector<1x8x4xf32>, vector<1x8x4xf32>, vector<1x8x8xf32> -> vector<1x8x8xf32>
    "tpu.trace_stop"() : () -> ()
    %cst_25 = arith.constant dense<0xFF800000> : vector<1x8xf32>
    %82 = vector.multi_reduction <maximumf>, %81, %cst_25 [2] : vector<1x8x8xf32> to vector<1x8xf32>
    %83 = vector.shape_cast %82 : vector<1x8xf32> to vector<1x8x1xf32>
    %84 = vector.broadcast %83 : vector<1x8x1xf32> to vector<1x8x8xf32>
    %85 = arith.subf %81, %84 : vector<1x8x8xf32>
    %86 = math.exp %85 : vector<1x8x8xf32>
    %cst_26 = arith.constant dense<0.000000e+00> : vector<1x8xf32>
    %87 = vector.multi_reduction <add>, %86, %cst_26 [2] : vector<1x8x8xf32> to vector<1x8xf32>
    %88 = vector.shape_cast %87 : vector<1x8xf32> to vector<1x8x1xf32>
    %89 = tpu.reciprocal %88 {approx = true} : vector<1x8x1xf32> -> vector<1x8x1xf32>
    %90 = vector.broadcast %89 : vector<1x8x1xf32> to vector<1x8x8xf32>
    %91 = arith.mulf %86, %90 : vector<1x8x8xf32>
    "tpu.trace_start"() <{level = 10 : i32, message = "bqk,bkd->bqd"}> : () -> ()
    %cst_27 = arith.constant dense<0.000000e+00> : vector<1x8x4xf32>
    %92 = tpu.matmul %91, %80, %cst_27 {dimension_numbers = #tpu.dot_dimension_numbers<[2], [1], [1], [2], [0, 0, 0, 1, 1, 2], [0], [0]>} : vector<1x8x8xf32>, vector<1x8x4xf32>, vector<1x8x4xf32> -> vector<1x8x4xf32>
    "tpu.trace_stop"() : () -> ()
    %93 = vector.shape_cast %92 : vector<1x8x4xf32> to vector<8x4xf32>
    %94 = vector.extract_strided_slice %7 {offsets = [12, 0], sizes = [4, 32], strides = [1, 1]} : vector<32x32xf32> to vector<4x32xf32>
    %cst_28 = arith.constant dense<0.000000e+00> : vector<8x32xf32>
    %95 = tpu.matmul %93, %94, %cst_28 {dimension_numbers = #tpu.dot_dimension_numbers<[1], [0], [0], [1], [0, 0, 1, 1], [], []>} : vector<8x4xf32>, vector<4x32xf32>, vector<8x32xf32> -> vector<8x32xf32>
    %96 = arith.addf %74, %95 : vector<8x32xf32>
    %97 = vector.extract_strided_slice %6 {offsets = [0, 16], sizes = [8, 4], strides = [1, 1]} : vector<8x96xf32> to vector<8x4xf32>
    %98 = vector.shape_cast %97 : vector<8x4xf32> to vector<1x8x4xf32>
    %99 = vector.extract_strided_slice %6 {offsets = [0, 48], sizes = [8, 4], strides = [1, 1]} : vector<8x96xf32> to vector<8x4xf32>
    %100 = vector.shape_cast %99 : vector<8x4xf32> to vector<1x8x4xf32>
    %101 = vector.extract_strided_slice %6 {offsets = [0, 80], sizes = [8, 4], strides = [1, 1]} : vector<8x96xf32> to vector<8x4xf32>
    %102 = vector.shape_cast %101 : vector<8x4xf32> to vector<1x8x4xf32>
    "tpu.trace_start"() <{level = 10 : i32, message = "bqd,bkd->bqk"}> : () -> ()
    %cst_29 = arith.constant dense<0.000000e+00> : vector<1x8x8xf32>
    %103 = tpu.matmul %98, %100, %cst_29 {dimension_numbers = #tpu.dot_dimension_numbers<[2], [2], [1], [1], [0, 0, 0, 1, 1, 1], [0], [0]>} : vector<1x8x4xf32>, vector<1x8x4xf32>, vector<1x8x8xf32> -> vector<1x8x8xf32>
    "tpu.trace_stop"() : () -> ()
    %cst_30 = arith.constant dense<0xFF800000> : vector<1x8xf32>
    %104 = vector.multi_reduction <maximumf>, %103, %cst_30 [2] : vector<1x8x8xf32> to vector<1x8xf32>
    %105 = vector.shape_cast %104 : vector<1x8xf32> to vector<1x8x1xf32>
    %106 = vector.broadcast %105 : vector<1x8x1xf32> to vector<1x8x8xf32>
    %107 = arith.subf %103, %106 : vector<1x8x8xf32>
    %108 = math.exp %107 : vector<1x8x8xf32>
    %cst_31 = arith.constant dense<0.000000e+00> : vector<1x8xf32>
    %109 = vector.multi_reduction <add>, %108, %cst_31 [2] : vector<1x8x8xf32> to vector<1x8xf32>
    %110 = vector.shape_cast %109 : vector<1x8xf32> to vector<1x8x1xf32>
    %111 = tpu.reciprocal %110 {approx = true} : vector<1x8x1xf32> -> vector<1x8x1xf32>
    %112 = vector.broadcast %111 : vector<1x8x1xf32> to vector<1x8x8xf32>
    %113 = arith.mulf %108, %112 : vector<1x8x8xf32>
    "tpu.trace_start"() <{level = 10 : i32, message = "bqk,bkd->bqd"}> : () -> ()
    %cst_32 = arith.constant dense<0.000000e+00> : vector<1x8x4xf32>
    %114 = tpu.matmul %113, %102, %cst_32 {dimension_numbers = #tpu.dot_dimension_numbers<[2], [1], [1], [2], [0, 0, 0, 1, 1, 2], [0], [0]>} : vector<1x8x8xf32>, vector<1x8x4xf32>, vector<1x8x4xf32> -> vector<1x8x4xf32>
    "tpu.trace_stop"() : () -> ()
    %115 = vector.shape_cast %114 : vector<1x8x4xf32> to vector<8x4xf32>
    %116 = vector.extract_strided_slice %7 {offsets = [16, 0], sizes = [4, 32], strides = [1, 1]} : vector<32x32xf32> to vector<4x32xf32>
    %cst_33 = arith.constant dense<0.000000e+00> : vector<8x32xf32>
    %117 = tpu.matmul %115, %116, %cst_33 {dimension_numbers = #tpu.dot_dimension_numbers<[1], [0], [0], [1], [0, 0, 1, 1], [], []>} : vector<8x4xf32>, vector<4x32xf32>, vector<8x32xf32> -> vector<8x32xf32>
    %118 = arith.addf %96, %117 : vector<8x32xf32>
    %119 = vector.extract_strided_slice %6 {offsets = [0, 20], sizes = [8, 4], strides = [1, 1]} : vector<8x96xf32> to vector<8x4xf32>
    %120 = vector.shape_cast %119 : vector<8x4xf32> to vector<1x8x4xf32>
    %121 = vector.extract_strided_slice %6 {offsets = [0, 52], sizes = [8, 4], strides = [1, 1]} : vector<8x96xf32> to vector<8x4xf32>
    %122 = vector.shape_cast %121 : vector<8x4xf32> to vector<1x8x4xf32>
    %123 = vector.extract_strided_slice %6 {offsets = [0, 84], sizes = [8, 4], strides = [1, 1]} : vector<8x96xf32> to vector<8x4xf32>
    %124 = vector.shape_cast %123 : vector<8x4xf32> to vector<1x8x4xf32>
    "tpu.trace_start"() <{level = 10 : i32, message = "bqd,bkd->bqk"}> : () -> ()
    %cst_34 = arith.constant dense<0.000000e+00> : vector<1x8x8xf32>
    %125 = tpu.matmul %120, %122, %cst_34 {dimension_numbers = #tpu.dot_dimension_numbers<[2], [2], [1], [1], [0, 0, 0, 1, 1, 1], [0], [0]>} : vector<1x8x4xf32>, vector<1x8x4xf32>, vector<1x8x8xf32> -> vector<1x8x8xf32>
    "tpu.trace_stop"() : () -> ()
    %cst_35 = arith.constant dense<0xFF800000> : vector<1x8xf32>
    %126 = vector.multi_reduction <maximumf>, %125, %cst_35 [2] : vector<1x8x8xf32> to vector<1x8xf32>
    %127 = vector.shape_cast %126 : vector<1x8xf32> to vector<1x8x1xf32>
    %128 = vector.broadcast %127 : vector<1x8x1xf32> to vector<1x8x8xf32>
    %129 = arith.subf %125, %128 : vector<1x8x8xf32>
    %130 = math.exp %129 : vector<1x8x8xf32>
    %cst_36 = arith.constant dense<0.000000e+00> : vector<1x8xf32>
    %131 = vector.multi_reduction <add>, %130, %cst_36 [2] : vector<1x8x8xf32> to vector<1x8xf32>
    %132 = vector.shape_cast %131 : vector<1x8xf32> to vector<1x8x1xf32>
    %133 = tpu.reciprocal %132 {approx = true} : vector<1x8x1xf32> -> vector<1x8x1xf32>
    %134 = vector.broadcast %133 : vector<1x8x1xf32> to vector<1x8x8xf32>
    %135 = arith.mulf %130, %134 : vector<1x8x8xf32>
    "tpu.trace_start"() <{level = 10 : i32, message = "bqk,bkd->bqd"}> : () -> ()
    %cst_37 = arith.constant dense<0.000000e+00> : vector<1x8x4xf32>
    %136 = tpu.matmul %135, %124, %cst_37 {dimension_numbers = #tpu.dot_dimension_numbers<[2], [1], [1], [2], [0, 0, 0, 1, 1, 2], [0], [0]>} : vector<1x8x8xf32>, vector<1x8x4xf32>, vector<1x8x4xf32> -> vector<1x8x4xf32>
    "tpu.trace_stop"() : () -> ()
    %137 = vector.shape_cast %136 : vector<1x8x4xf32> to vector<8x4xf32>
    %138 = vector.extract_strided_slice %7 {offsets = [20, 0], sizes = [4, 32], strides = [1, 1]} : vector<32x32xf32> to vector<4x32xf32>
    %cst_38 = arith.constant dense<0.000000e+00> : vector<8x32xf32>
    %139 = tpu.matmul %137, %138, %cst_38 {dimension_numbers = #tpu.dot_dimension_numbers<[1], [0], [0], [1], [0, 0, 1, 1], [], []>} : vector<8x4xf32>, vector<4x32xf32>, vector<8x32xf32> -> vector<8x32xf32>
    %140 = arith.addf %118, %139 : vector<8x32xf32>
    %141 = vector.extract_strided_slice %6 {offsets = [0, 24], sizes = [8, 4], strides = [1, 1]} : vector<8x96xf32> to vector<8x4xf32>
    %142 = vector.shape_cast %141 : vector<8x4xf32> to vector<1x8x4xf32>
    %143 = vector.extract_strided_slice %6 {offsets = [0, 56], sizes = [8, 4], strides = [1, 1]} : vector<8x96xf32> to vector<8x4xf32>
    %144 = vector.shape_cast %143 : vector<8x4xf32> to vector<1x8x4xf32>
    %145 = vector.extract_strided_slice %6 {offsets = [0, 88], sizes = [8, 4], strides = [1, 1]} : vector<8x96xf32> to vector<8x4xf32>
    %146 = vector.shape_cast %145 : vector<8x4xf32> to vector<1x8x4xf32>
    "tpu.trace_start"() <{level = 10 : i32, message = "bqd,bkd->bqk"}> : () -> ()
    %cst_39 = arith.constant dense<0.000000e+00> : vector<1x8x8xf32>
    %147 = tpu.matmul %142, %144, %cst_39 {dimension_numbers = #tpu.dot_dimension_numbers<[2], [2], [1], [1], [0, 0, 0, 1, 1, 1], [0], [0]>} : vector<1x8x4xf32>, vector<1x8x4xf32>, vector<1x8x8xf32> -> vector<1x8x8xf32>
    "tpu.trace_stop"() : () -> ()
    %cst_40 = arith.constant dense<0xFF800000> : vector<1x8xf32>
    %148 = vector.multi_reduction <maximumf>, %147, %cst_40 [2] : vector<1x8x8xf32> to vector<1x8xf32>
    %149 = vector.shape_cast %148 : vector<1x8xf32> to vector<1x8x1xf32>
    %150 = vector.broadcast %149 : vector<1x8x1xf32> to vector<1x8x8xf32>
    %151 = arith.subf %147, %150 : vector<1x8x8xf32>
    %152 = math.exp %151 : vector<1x8x8xf32>
    %cst_41 = arith.constant dense<0.000000e+00> : vector<1x8xf32>
    %153 = vector.multi_reduction <add>, %152, %cst_41 [2] : vector<1x8x8xf32> to vector<1x8xf32>
    %154 = vector.shape_cast %153 : vector<1x8xf32> to vector<1x8x1xf32>
    %155 = tpu.reciprocal %154 {approx = true} : vector<1x8x1xf32> -> vector<1x8x1xf32>
    %156 = vector.broadcast %155 : vector<1x8x1xf32> to vector<1x8x8xf32>
    %157 = arith.mulf %152, %156 : vector<1x8x8xf32>
    "tpu.trace_start"() <{level = 10 : i32, message = "bqk,bkd->bqd"}> : () -> ()
    %cst_42 = arith.constant dense<0.000000e+00> : vector<1x8x4xf32>
    %158 = tpu.matmul %157, %146, %cst_42 {dimension_numbers = #tpu.dot_dimension_numbers<[2], [1], [1], [2], [0, 0, 0, 1, 1, 2], [0], [0]>} : vector<1x8x8xf32>, vector<1x8x4xf32>, vector<1x8x4xf32> -> vector<1x8x4xf32>
    "tpu.trace_stop"() : () -> ()
    %159 = vector.shape_cast %158 : vector<1x8x4xf32> to vector<8x4xf32>
    %160 = vector.extract_strided_slice %7 {offsets = [24, 0], sizes = [4, 32], strides = [1, 1]} : vector<32x32xf32> to vector<4x32xf32>
    %cst_43 = arith.constant dense<0.000000e+00> : vector<8x32xf32>
    %161 = tpu.matmul %159, %160, %cst_43 {dimension_numbers = #tpu.dot_dimension_numbers<[1], [0], [0], [1], [0, 0, 1, 1], [], []>} : vector<8x4xf32>, vector<4x32xf32>, vector<8x32xf32> -> vector<8x32xf32>
    %162 = arith.addf %140, %161 : vector<8x32xf32>
    %163 = vector.extract_strided_slice %6 {offsets = [0, 28], sizes = [8, 4], strides = [1, 1]} : vector<8x96xf32> to vector<8x4xf32>
    %164 = vector.shape_cast %163 : vector<8x4xf32> to vector<1x8x4xf32>
    %165 = vector.extract_strided_slice %6 {offsets = [0, 60], sizes = [8, 4], strides = [1, 1]} : vector<8x96xf32> to vector<8x4xf32>
    %166 = vector.shape_cast %165 : vector<8x4xf32> to vector<1x8x4xf32>
    %167 = vector.extract_strided_slice %6 {offsets = [0, 92], sizes = [8, 4], strides = [1, 1]} : vector<8x96xf32> to vector<8x4xf32>
    %168 = vector.shape_cast %167 : vector<8x4xf32> to vector<1x8x4xf32>
    "tpu.trace_start"() <{level = 10 : i32, message = "bqd,bkd->bqk"}> : () -> ()
    %cst_44 = arith.constant dense<0.000000e+00> : vector<1x8x8xf32>
    %169 = tpu.matmul %164, %166, %cst_44 {dimension_numbers = #tpu.dot_dimension_numbers<[2], [2], [1], [1], [0, 0, 0, 1, 1, 1], [0], [0]>} : vector<1x8x4xf32>, vector<1x8x4xf32>, vector<1x8x8xf32> -> vector<1x8x8xf32>
    "tpu.trace_stop"() : () -> ()
    %cst_45 = arith.constant dense<0xFF800000> : vector<1x8xf32>
    %170 = vector.multi_reduction <maximumf>, %169, %cst_45 [2] : vector<1x8x8xf32> to vector<1x8xf32>
    %171 = vector.shape_cast %170 : vector<1x8xf32> to vector<1x8x1xf32>
    %172 = vector.broadcast %171 : vector<1x8x1xf32> to vector<1x8x8xf32>
    %173 = arith.subf %169, %172 : vector<1x8x8xf32>
    %174 = math.exp %173 : vector<1x8x8xf32>
    %cst_46 = arith.constant dense<0.000000e+00> : vector<1x8xf32>
    %175 = vector.multi_reduction <add>, %174, %cst_46 [2] : vector<1x8x8xf32> to vector<1x8xf32>
    %176 = vector.shape_cast %175 : vector<1x8xf32> to vector<1x8x1xf32>
    %177 = tpu.reciprocal %176 {approx = true} : vector<1x8x1xf32> -> vector<1x8x1xf32>
    %178 = vector.broadcast %177 : vector<1x8x1xf32> to vector<1x8x8xf32>
    %179 = arith.mulf %174, %178 : vector<1x8x8xf32>
    "tpu.trace_start"() <{level = 10 : i32, message = "bqk,bkd->bqd"}> : () -> ()
    %cst_47 = arith.constant dense<0.000000e+00> : vector<1x8x4xf32>
    %180 = tpu.matmul %179, %168, %cst_47 {dimension_numbers = #tpu.dot_dimension_numbers<[2], [1], [1], [2], [0, 0, 0, 1, 1, 2], [0], [0]>} : vector<1x8x8xf32>, vector<1x8x4xf32>, vector<1x8x4xf32> -> vector<1x8x4xf32>
    "tpu.trace_stop"() : () -> ()
    %181 = vector.shape_cast %180 : vector<1x8x4xf32> to vector<8x4xf32>
    %182 = vector.extract_strided_slice %7 {offsets = [28, 0], sizes = [4, 32], strides = [1, 1]} : vector<32x32xf32> to vector<4x32xf32>
    %cst_48 = arith.constant dense<0.000000e+00> : vector<8x32xf32>
    %183 = tpu.matmul %181, %182, %cst_48 {dimension_numbers = #tpu.dot_dimension_numbers<[1], [0], [0], [1], [0, 0, 1, 1], [], []>} : vector<8x4xf32>, vector<4x32xf32>, vector<8x32xf32> -> vector<8x32xf32>
    %184 = arith.addf %162, %183 : vector<8x32xf32>
    %c0_49 = arith.constant 0 : index
    %c0_50 = arith.constant 0 : index
    %185 = vector.load %arg5[%c0_49, %c0_50] : memref<1x32xf32, #tpu.memory_space<vmem>>, vector<1x32xf32>
    %186 = vector.broadcast %185 : vector<1x32xf32> to vector<8x32xf32>
    %187 = arith.addf %184, %186 : vector<8x32xf32>
    %cst_51 = arith.constant 0.000000e+00 : f32
    %188 = vector.broadcast %cst_51 : f32 to vector<8x32xf32>
    %189 = arith.maximumf %187, %188 : vector<8x32xf32>
    %cst_52 = arith.constant dense<0.000000e+00> : vector<8xf32>
    %190 = vector.multi_reduction <add>, %189, %cst_52 [1] : vector<8x32xf32> to vector<8xf32>
    %191 = vector.shape_cast %190 : vector<8xf32> to vector<8x1xf32>
    %cst_53 = arith.constant 3.200000e+01 : f32
    %192 = vector.broadcast %cst_53 : f32 to vector<8x1xf32>
    %193 = arith.divf %191, %192 : vector<8x1xf32>
    %194 = vector.broadcast %193 : vector<8x1xf32> to vector<8x32xf32>
    %195 = arith.subf %189, %194 : vector<8x32xf32>
    %196 = arith.mulf %195, %195 : vector<8x32xf32>
    %cst_54 = arith.constant dense<0.000000e+00> : vector<8xf32>
    %197 = vector.multi_reduction <add>, %196, %cst_54 [1] : vector<8x32xf32> to vector<8xf32>
    %198 = vector.shape_cast %197 : vector<8xf32> to vector<8x1xf32>
    %cst_55 = arith.constant 3.200000e+01 : f32
    %199 = vector.broadcast %cst_55 : f32 to vector<8x1xf32>
    %200 = arith.divf %198, %199 : vector<8x1xf32>
    %cst_56 = arith.constant 9.99999974E-6 : f32
    %201 = vector.broadcast %cst_56 : f32 to vector<8x1xf32>
    %202 = arith.addf %200, %201 : vector<8x1xf32>
    %203 = math.rsqrt %202 : vector<8x1xf32>
    %204 = vector.broadcast %203 : vector<8x1xf32> to vector<8x32xf32>
    %205 = arith.mulf %195, %204 : vector<8x32xf32>
    %206 = vector.shape_cast %205 : vector<8x32xf32> to vector<1x8x32xf32>
    %c0_57 = arith.constant 0 : index
    %c0_58 = arith.constant 0 : index
    %c0_59 = arith.constant 0 : index
    %207 = vector.load %arg6[%c0_57, %c0_58, %c0_59] : memref<1x8x32xf32, #tpu.memory_space<vmem>>, vector<1x8x32xf32>
    tpu.vector_store %arg6[%c0_57, %c0_58, %c0_59], %206 {strides = array<i32>} : memref<1x8x32xf32, #tpu.memory_space<vmem>>, vector<1x8x32xf32>,
    return
  }
  func.func @transform_0(%arg0: i32) -> (i32, i32, i32) {
    %c0_i32 = arith.constant 0 : i32
    %c0_i32_0 = arith.constant 0 : i32
    %c0_i32_1 = arith.constant 0 : i32
    return %arg0, %c0_i32, %c0_i32_0 : i32, i32, i32
  }
  func.func @transform_1(%arg0: i32) -> (i32, i32) {
    %c0_i32 = arith.constant 0 : i32
    %c0_i32_0 = arith.constant 0 : i32
    %c0_i32_1 = arith.constant 0 : i32
    return %c0_i32, %c0_i32_0 : i32, i32
  }
  func.func @transform_2(%arg0: i32) -> (i32, i32) {
    %c0_i32 = arith.constant 0 : i32
    %c0_i32_0 = arith.constant 0 : i32
    %c0_i32_1 = arith.constant 0 : i32
    return %c0_i32, %c0_i32_0 : i32, i32
  }
  func.func @transform_3(%arg0: i32) -> (i32, i32) {
    %c0_i32 = arith.constant 0 : i32
    %c0_i32_0 = arith.constant 0 : i32
    %c0_i32_1 = arith.constant 0 : i32
    return %c0_i32, %c0_i32_0 : i32, i32
  }
  func.func @transform_4(%arg0: i32) -> (i32, i32) {
    %c0_i32 = arith.constant 0 : i32
    %c0_i32_0 = arith.constant 0 : i32
    %c0_i32_1 = arith.constant 0 : i32
    return %c0_i32, %c0_i32_0 : i32, i32
  }
  func.func @transform_5(%arg0: i32) -> (i32, i32, i32) {
    %c0_i32 = arith.constant 0 : i32
    %c0_i32_0 = arith.constant 0 : i32
    %c0_i32_1 = arith.constant 0 : i32
    return %arg0, %c0_i32, %c0_i32_0 : i32, i32, i32
  }
}

</mosaic_0001>

<llo_original>
// kernel: tpu_custom_call.1
$region0: #{tpu_custom_call.1}
  #allocation0 [shape = 'u32[]', space=smem, size = 0x4, offset = 0x4, fixed_abs, tag = 'smem constant byte address 0x4 - core index']
  #allocation1 [shape = 'u32[144,128]{1,0:T(1,128)}', space=vmem, size = 0x12000, scoped, tag = 'internal scratch']
  %s0 = inlined_call_operand.hbm [shape: f32[2,8,32], index: 0, kind: input, shape index: {}]
  %s1 = inlined_call_operand.hbm [shape: f32[32,96], index: 1, kind: input, shape index: {}]
  %s2 = inlined_call_operand.vmem [shape: f32[1,96], index: 2, kind: input, shape index: {}]
  %s3 = inlined_call_operand.hbm [shape: f32[32,32], index: 3, kind: input, shape index: {}]
  %s4 = inlined_call_operand.vmem [shape: f32[1,32], index: 4, kind: input, shape index: {}]
  %s5 = inlined_call_operand.hbm [shape: f32[2,8,32], index: 5, kind: output, shape index: {}]
  %s6 = sld [smem:[#allocation0]]
  $region65: #{tpu_custom_call.1} parent=0
    _
  %s8 = ssub.s32 1, %s6
  %s9 = scalar_select 0, %s8, %s6
  $region1: #{tpu_custom_call.1} parent=0
    #allocation2 [shape = 'u8[8192]{0}', space=vmem, size = 0x2000, scoped, tag = 'input window, operand 0']
    #allocation3 [shape = 's32[2]{0}', space=sflag, size = 0x8, scoped, tag = 'scoped memory for tpu_custom_call.1']
    #allocation4 [shape = 's32[2]{0}', space=sflag, size = 0x8, scoped, tag = 'scoped memory for tpu_custom_call.1']
    #allocation5 [shape = 'u8[16384]{0}', space=vmem, size = 0x4000, scoped, tag = 'input window, operand 1, single buffered']
    #allocation6 [shape = 's32[1]{0}', space=sflag, size = 0x4, scoped, tag = 'scoped memory for tpu_custom_call.1']
    #allocation7 [shape = 'u8[16384]{0}', space=vmem, size = 0x4000, scoped, tag = 'input window, operand 3, single buffered']
    #allocation8 [shape = 'u8[8192]{0}', space=vmem, size = 0x2000, scoped, tag = 'output window, operand 0']
    %10 = vsyncpa [#allocation3], 0
    %s11 = scalar_lea.sflag [#allocation3], 1
    %12 = vsyncpa %s11, 0
    %13 = vsyncpa [#allocation6], 0
    %14 = vsyncpa [#allocation4], 0
    %s15 = scalar_lea.sflag [#allocation4], 1
    %16 = vsyncpa %s15, 0
    loop: start=0, step=1, limit=4
    $region2: #{tpu_custom_call.1} parent=1 // loop_pre_header
      _
    $region3: #{tpu_custom_call.1} parent=1 // loop_header
      %s18 = sphi 0, %s22
      %p19 = scmp.ge.s32.totalorder %s18, 4
      %s28 = sphi 0, %s30
      %s31 = sphi 0, %s28
      %s32 = sphi 0, %s31
      %s48 = sphi 0, %s32
      %s52 = sphi 0, %s52
      %s54 = sphi 0, %s52
      %s55 = sphi 0, %s54
      %s69 = sphi 0, %s55
      %s73 = sphi 0, %s73
      %s75 = sphi 0, %s73
      %s76 = sphi 0, %s75
      %s90 = sphi 0, %s76
      %s94 = sphi 0, %s94
      %s96 = sphi 0, %s94
      %s97 = sphi 0, %s96
      %s111 = sphi 0, %s97
      %s115 = sphi 0, %s115
      %s117 = sphi 0, %s115
      %s118 = sphi 0, %s117
      %s132 = sphi 0, %s118
      %s138 = sphi 0, %s140
      %s141 = sphi 0, %s138
      %s142 = sphi 0, %s141
      %s158 = sphi 0, %s142
    $region4: #{tpu_custom_call.1} parent=1 // loop_header_branch
      %21 = sbr.rel (%p19) target = $region8
    $region5: #{tpu_custom_call.1} parent=1 // loop_body
      %s23 = ssub.s32 %s18, 1
      %s24 = ssub.s32 %s18, 2
      %s25 = sadd.s32 %s18, 1
      %s26 = ssub.s32 %s18, %s25
      %p27 = scmp.eq.s32.totalorder %s26, 0
      %s29 = sadd.s32 %s28, 1
      %s30 = scalar_select %p27, %s28, %s29
      %p33 = pneg %p27
      %p34 = scmp.eq.s32.totalorder %s18, 1
      %p35 = por %p33, %p34
      %p36 = scmp.ne.s32.totalorder %s28, %s31
      %p37 = scmp.eq.s32.totalorder %s18, 0
      %p38 = por %p36, %p37
      %p39 = scmp.ne.s32.totalorder %s28, %s31
      %p40 = scmp.eq.s32.totalorder %s23, 1
      %p41 = por %p39, %p40
      %p42 = scmp.ne.s32.totalorder %s31, %s32
      %p43 = scmp.eq.s32.totalorder %s23, 0
      %p44 = por %p42, %p43
      %p45 = scmp.ne.s32.totalorder %s31, %s32
      %p46 = scmp.eq.s32.totalorder %s24, 1
      %p47 = por %p45, %p46
      %p49 = scmp.ne.s32.totalorder %s32, %s48
      %p50 = scmp.eq.s32.totalorder %s24, 0
      %p51 = por %p49, %p50
      %s53 = sadd.s32 %s52, 1
      %p56 = scmp.eq.s32.totalorder %s18, 1
      %p57 = scmp.ne.s32.totalorder %s52, %s54
      %p58 = scmp.eq.s32.totalorder %s18, 0
      %p59 = por %p57, %p58
      %p60 = scmp.ne.s32.totalorder %s52, %s54
      %p61 = scmp.eq.s32.totalorder %s23, 1
      %p62 = por %p60, %p61
      %p63 = scmp.ne.s32.totalorder %s54, %s55
      %p64 = scmp.eq.s32.totalorder %s23, 0
      %p65 = por %p63, %p64
      %p66 = scmp.ne.s32.totalorder %s54, %s55
      %p67 = scmp.eq.s32.totalorder %s24, 1
      %p68 = por %p66, %p67
      %p70 = scmp.ne.s32.totalorder %s55, %s69
      %p71 = scmp.eq.s32.totalorder %s24, 0
      %p72 = por %p70, %p71
      %s74 = sadd.s32 %s73, 1
      %p77 = scmp.eq.s32.totalorder %s18, 1
      %p78 = scmp.ne.s32.totalorder %s73, %s75
      %p79 = scmp.eq.s32.totalorder %s18, 0
      %p80 = por %p78, %p79
      %p81 = scmp.ne.s32.totalorder %s73, %s75
      %p82 = scmp.eq.s32.totalorder %s23, 1
      %p83 = por %p81, %p82
      %p84 = scmp.ne.s32.totalorder %s75, %s76
      %p85 = scmp.eq.s32.totalorder %s23, 0
      %p86 = por %p84, %p85
      %p87 = scmp.ne.s32.totalorder %s75, %s76
      %p88 = scmp.eq.s32.totalorder %s24, 1
      %p89 = por %p87, %p88
      %p91 = scmp.ne.s32.totalorder %s76, %s90
      %p92 = scmp.eq.s32.totalorder %s24, 0
      %p93 = por %p91, %p92
      %s95 = sadd.s32 %s94, 1
      %p98 = scmp.eq.s32.totalorder %s18, 1
      %p99 = scmp.ne.s32.totalorder %s94, %s96
      %p100 = scmp.eq.s32.totalorder %s18, 0
      %p101 = por %p99, %p100
      %p102 = scmp.ne.s32.totalorder %s94, %s96
      %p103 = scmp.eq.s32.totalorder %s23, 1
      %p104 = por %p102, %p103
      %p105 = scmp.ne.s32.totalorder %s96, %s97
      %p106 = scmp.eq.s32.totalorder %s23, 0
      %p107 = por %p105, %p106
      %p108 = scmp.ne.s32.totalorder %s96, %s97
      %p109 = scmp.eq.s32.totalorder %s24, 1
      %p110 = por %p108, %p109
      %p112 = scmp.ne.s32.totalorder %s97, %s111
      %p113 = scmp.eq.s32.totalorder %s24, 0
      %p114 = por %p112, %p113
      %s116 = sadd.s32 %s115, 1
      %p119 = scmp.eq.s32.totalorder %s18, 1
      %p120 = scmp.ne.s32.totalorder %s115, %s117
      %p121 = scmp.eq.s32.totalorder %s18, 0
      %p122 = por %p120, %p121
      %p123 = scmp.ne.s32.totalorder %s115, %s117
      %p124 = scmp.eq.s32.totalorder %s23, 1
      %p125 = por %p123, %p124
      %p126 = scmp.ne.s32.totalorder %s117, %s118
      %p127 = scmp.eq.s32.totalorder %s23, 0
      %p128 = por %p126, %p127
      %p129 = scmp.ne.s32.totalorder %s117, %s118
      %p130 = scmp.eq.s32.totalorder %s24, 1
      %p131 = por %p129, %p130
      %p133 = scmp.ne.s32.totalorder %s118, %s132
      %p134 = scmp.eq.s32.totalorder %s24, 0
      %p135 = por %p133, %p134
      %s136 = ssub.s32 %s18, %s25
      %p137 = scmp.eq.s32.totalorder %s136, 0
      %s139 = sadd.s32 %s138, 1
      %s140 = scalar_select %p137, %s138, %s139
      %p143 = pneg %p137
      %p144 = scmp.eq.s32.totalorder %s18, 1
      %p145 = por %p143, %p144
      %p146 = scmp.ne.s32.totalorder %s138, %s141
      %p147 = scmp.eq.s32.totalorder %s18, 0
      %p148 = por %p146, %p147
      %p149 = scmp.ne.s32.totalorder %s138, %s141
      %p150 = scmp.eq.s32.totalorder %s23, 1
      %p151 = por %p149, %p150
      %p152 = scmp.ne.s32.totalorder %s141, %s142
      %p153 = scmp.eq.s32.totalorder %s23, 0
      %p154 = por %p152, %p153
      %p155 = scmp.ne.s32.totalorder %s141, %s142
      %p156 = scmp.eq.s32.totalorder %s24, 1
      %p157 = por %p155, %p156
      %p159 = scmp.ne.s32.totalorder %s142, %s158
      %p160 = scmp.eq.s32.totalorder %s24, 0
      %p161 = por %p159, %p160
      %p162 = scmp.le.s32.totalorder 1, %s18
      %p163 = scmp.lt.s32.totalorder %s18, 3
      %p164 = pnand %p162, %p163
      %p165 = pneg %p164
      // Predicated region
      $region9: #{tpu_custom_call.1} parent=5 // pred_check
        _
      $region10: #{tpu_custom_call.1} parent=5 // pred_check_branch
        %167 = sbr.rel (%p164) target = $region12
      $region11: #{tpu_custom_call.1} parent=5 // pred_region
        %s168 = ssub.s32 %s18, 1
        // Predicated region
        $region13: #{tpu_custom_call.1} parent=11 // pred_check
          %p169 = pneg %p65
        $region14: #{tpu_custom_call.1} parent=11 // pred_check_branch
          %171 = sbr.rel (%p169) target = $region16
        $region15: #{tpu_custom_call.1} parent=11 // pred_region
          %s173 = ssub.s32 512, 512
          %174 = vsyncadd [#allocation6], %s173
          %s175 = sshll.u32 [#allocation5], 4
          %s176 = int_to_ptr.vmem [resolvable:$true] %s175
          %181 = dma.hbm_to_vmem [thread:$0]  %s1, 512, %s176, [#allocation6], 128, 128, 8
        $region16: #{tpu_custom_call.1} parent=11 // pred_fallthru
          _
        // Predicated region
        $region17: #{tpu_custom_call.1} parent=11 // pred_check
          %p182 = pneg %p86
        $region18: #{tpu_custom_call.1} parent=11 // pred_check_branch
          %184 = sbr.rel (%p182) target = $region20
        $region19: #{tpu_custom_call.1} parent=11 // pred_region
          _
        $region20: #{tpu_custom_call.1} parent=11 // pred_fallthru
          _
        // Predicated region
        $region21: #{tpu_custom_call.1} parent=11 // pred_check
          %p185 = pneg %p107
        $region22: #{tpu_custom_call.1} parent=11 // pred_check_branch
          %187 = sbr.rel (%p185) target = $region24
        $region23: #{tpu_custom_call.1} parent=11 // pred_region
          %s189 = ssub.s32 512, 512
          %190 = vsyncadd [#allocation6], %s189
          %s191 = sshll.u32 [#allocation7], 4
          %s192 = int_to_ptr.vmem [resolvable:$true] %s191
          %197 = dma.hbm_to_vmem [thread:$0]  %s3, 512, %s192, [#allocation6], 128, 128, 8
        $region24: #{tpu_custom_call.1} parent=11 // pred_fallthru
          _
        // Predicated region
        $region25: #{tpu_custom_call.1} parent=11 // pred_check
          %p198 = pneg %p128
        $region26: #{tpu_custom_call.1} parent=11 // pred_check_branch
          %200 = sbr.rel (%p198) target = $region28
        $region27: #{tpu_custom_call.1} parent=11 // pred_region
          _
        $region28: #{tpu_custom_call.1} parent=11 // pred_fallthru
          _
      $region12: #{tpu_custom_call.1} parent=5 // pred_fallthru
        _
      %p201 = scmp.lt.s32.totalorder %s18, 2
      // Predicated region
      $region29: #{tpu_custom_call.1} parent=5 // pred_check
        %p202 = pneg %p201
      $region30: #{tpu_custom_call.1} parent=5 // pred_check_branch
        %204 = sbr.rel (%p202) target = $region32
      $region31: #{tpu_custom_call.1} parent=5 // pred_region
        // Predicated region
        $region33: #{tpu_custom_call.1} parent=31 // pred_check
          %p205 = pneg %p38
        $region34: #{tpu_custom_call.1} parent=31 // pred_check_branch
          %207 = sbr.rel (%p205) target = $region36
        $region35: #{tpu_custom_call.1} parent=31 // pred_region
          %s208 = sand.u32 %s28, 1
          %s209 = scalar_lea.sflag [#allocation3], %s208
          %s210 = sand.u32 %s28, 1
          %s211 = smul.addr %s210, 8
          %s212 = scalar_lea.vmem [#allocation2], %s211
          %s214 = ssub.s32 128, 128
          %215 = vsyncadd %s209, %s214
          %s216 = smul.addr %s18, 128
          %s217 = scalar_lea.hbm %s0, %s216
          %s219 = sshll.u32 %s212, 4
          %s220 = int_to_ptr.vmem [resolvable:$true] %s219
          %222 = dma.hbm_to_vmem [thread:$0]  %s217, 128, %s220, %s209
        $region36: #{tpu_custom_call.1} parent=31 // pred_fallthru
          _
      $region32: #{tpu_custom_call.1} parent=5 // pred_fallthru
        _
      %p223 = scmp.le.s32.totalorder 1, %s18
      %p224 = scmp.lt.s32.totalorder %s18, 3
      %p225 = pnand %p223, %p224
      %p226 = pneg %p225
      // Predicated region
      $region37: #{tpu_custom_call.1} parent=5 // pred_check
        _
      $region38: #{tpu_custom_call.1} parent=5 // pred_check_branch
        %228 = sbr.rel (%p225) target = $region40
      $region39: #{tpu_custom_call.1} parent=5 // pred_region
        %s229 = ssub.s32 %s18, 1
        %s230 = sand.u32 %s31, 1
        %s231 = scalar_lea.sflag [#allocation3], %s230
        %s232 = sand.u32 %s31, 1
        %s233 = smul.addr %s232, 8
        %s234 = scalar_lea.vmem [#allocation2], %s233
        // Predicated region
        $region41: #{tpu_custom_call.1} parent=39 // pred_check
          %p235 = pneg %p44
        $region42: #{tpu_custom_call.1} parent=39 // pred_check_branch
          %237 = sbr.rel (%p235) target = $region44
        $region43: #{tpu_custom_call.1} parent=39 // pred_region
          %238 = dma.done %s231, 128
        $region44: #{tpu_custom_call.1} parent=39 // pred_fallthru
          _
        // Predicated region
        $region45: #{tpu_custom_call.1} parent=39 // pred_check
          %p239 = pneg %p65
        $region46: #{tpu_custom_call.1} parent=39 // pred_check_branch
          %241 = sbr.rel (%p239) target = $region48
        $region47: #{tpu_custom_call.1} parent=39 // pred_region
          %242 = dma.done [#allocation6], 512
        $region48: #{tpu_custom_call.1} parent=39 // pred_fallthru
          _
        // Predicated region
        $region49: #{tpu_custom_call.1} parent=39 // pred_check
          %p243 = pneg %p107
        $region50: #{tpu_custom_call.1} parent=39 // pred_check_branch
          %245 = sbr.rel (%p243) target = $region52
        $region51: #{tpu_custom_call.1} parent=39 // pred_region
          %246 = dma.done [#allocation6], 512
        $region52: #{tpu_custom_call.1} parent=39 // pred_fallthru
          _
        %s247 = sand.u32 %s31, 1
        %s248 = scalar_lea.sflag [#allocation3], %s247
        %s249 = sand.u32 %s31, 1
        %s250 = smul.addr %s249, 8
        %s251 = scalar_lea.vmem [#allocation2], %s250
        %p252 = pneg %p44
        %p253 = pneg %p41
        %p254 = pneg %p65
        %p255 = pneg %p62
        %p256 = pneg %p86
        %p257 = pneg %p83
        %p258 = pneg %p107
        %p259 = pneg %p104
        %p260 = pneg %p128
        %p261 = pneg %p125
        %p262 = pneg %p154
        %p263 = pneg %p151
        %s264 = sand.u32 %s141, 1
        %s265 = scalar_lea.sflag [#allocation4], %s264
        %s266 = sand.u32 %s141, 1
        %s267 = smul.addr %s266, 8
        %s268 = scalar_lea.vmem [#allocation8], %s267
        %v269 = vld [vmem:[%s234] sm:$0xff]
        %v270 = vld [vmem:[#allocation5] sm:$0xff]
        %v271 = vld [vmem:[#allocation5 + $0x8] sm:$0xff]
        %v272 = vld [vmem:[#allocation5 + $0x10] sm:$0xff]
        %v273 = vld [vmem:[#allocation5 + $0x18] sm:$0xff]
        %v274 = vld [vmem:[%s2] sm:$0x1]
        %v276 = vlaneseq
        %v277 = vshrl.u32 %v276, 7
        %v278 = vsub.s32 0, %v277
        %v279 = vrot.slane %v274, %v278
        %vm281 = vcmask 261120
        %v283 = vsel %vm281, %v269, 0
        %285 = vmatprep.subr.mxu0 0.0
        %286 = vmatpush1.msra.mxu0 %v270
        %287 = vmatprep.subr.mxu0 0.0
        %288 = vmatpush1.msra.mxu0 %v271
        %289 = vmatprep.subr.mxu0 0.0
        %290 = vmatpush1.msra.mxu0 %v272
        %291 = vmatprep.subr.mxu0 0.0
        %292 = vmatpush1.msra.mxu0 %v273
        %293 = vmatprep.subr.mxu0 0.0
        %294 = vmatpush1.msra.mxu0 0.0
        %295 = vmatprep.subr.mxu0 0.0
        %296 = vmatpush1.msra.mxu0 0.0
        %297 = vmatprep.subr.mxu0 0.0
        %298 = vmatpush1.msra.mxu0 0.0
        %299 = vmatprep.subr.mxu0 0.0
        %300 = vmatpush1.msra.mxu0 0.0
        %301 = vmatprep.subr.mxu0 0.0
        %302 = vmatpush1.msra.mxu0 0.0
        %303 = vmatprep.subr.mxu0 0.0
        %304 = vmatpush1.msra.mxu0 0.0
        %305 = vmatprep.subr.mxu0 0.0
        %306 = vmatpush1.msra.mxu0 0.0
        %307 = vmatprep.subr.mxu0 0.0
        %308 = vmatpush1.msra.mxu0 0.0
        %309 = vmatprep.subr.mxu0 0.0
        %310 = vmatpush1.msra.mxu0 0.0
        %311 = vmatprep.subr.mxu0 0.0
        %312 = vmatpush1.msra.mxu0 0.0
        %313 = vmatprep.subr.mxu0 0.0
        %314 = vmatpush1.msra.mxu0 0.0
        %315 = vmatprep.subr.mxu0 0.0
        %316 = vmatpush1.msra.mxu0 0.0
        %317 = vmatprep.subr.mxu0 0.0
        %318 = vmatpush1.msra.mxu0 0.0
        %319 = vmatprep.subr.mxu0 0.0
        %320 = vmatpush1.msra.mxu0 0.0
        %321 = vmatprep.subr.mxu0 0.0
        %322 = vmatpush1.msra.mxu0 0.0
        %323 = vmatprep.subr.mxu0 0.0
        %324 = vmatpush1.msra.mxu0 0.0
        %325 = vmatprep.subr.mxu0 0.0
        %326 = vmatpush1.msra.mxu0 0.0
        %327 = vmatprep.subr.mxu0 0.0
        %328 = vmatpush1.msra.mxu0 0.0
        %329 = vmatprep.subr.mxu0 0.0
        %330 = vmatpush1.msra.mxu0 0.0
        %331 = vmatprep.subr.mxu0 0.0
        %332 = vmatpush1.msra.mxu0 0.0
        %333 = vmatprep.subr.mxu0 0.0
        %334 = vmatpush1.msra.mxu0 0.0
        %335 = vmatprep.subr.mxu0 0.0
        %336 = vmatpush1.msra.mxu0 0.0
        %337 = vmatprep.subr.mxu0 0.0
        %338 = vmatpush1.msra.mxu0 0.0
        %339 = vmatprep.subr.mxu0 0.0
        %340 = vmatpush1.msra.mxu0 0.0
        %341 = vmatprep.subr.mxu0 0.0
        %342 = vmatpush1.msra.mxu0 0.0
        %343 = vmatprep.subr.mxu0 0.0
        %344 = vmatpush1.msra.mxu0 0.0
        %345 = vmatprep.subr.mxu0 0.0
        %346 = vmatpush1.msra.mxu0 0.0
        %347 = vmatprep.subr.mxu0 0.0
        %348 = vmatpush1.msra.mxu0 0.0
        %349 = vmatprep.mubr.f32.mxu0 0.0
        %350 = vmatmul.mubr.f32.gmra.mrb[0].mxu0 %v283
        %v351 = vpop.f32.mrb[0].mxu0
        %v352 = vadd.f32 %v279, %v351
        %v353 = vpop.f32.mrb[0].mxu0
        %354 = vdwg.mxu0
        %v355 = vld [vmem:[#allocation7] sm:$0xff]
        %v356 = vld [vmem:[#allocation7 + $0x8] sm:$0xff]
        %v357 = vld [vmem:[#allocation7 + $0x10] sm:$0xff]
        %v358 = vld [vmem:[#allocation7 + $0x18] sm:$0xff]
        %360 = vrot.lane.b32.xlu0 %v352, 96
        %v361 = vpop.permute.xlu0 %360
        %vm362 = vcmask 31744
        %v363 = vsel %vm362, %v352, 0
        %v365 = vsel %vm362, %v361, 0
        %367 = vmatprep.subr.mxu0 0.0
        %368 = vmatpush1.xpose.msra.mxu0 %v365
        %369 = vmatprep.subr.mxu0 0.0
        %370 = vmatpush1.xpose.msra.mxu0 0.0
        %371 = vmatprep.subr.mxu0 0.0
        %372 = vmatpush1.xpose.msra.mxu0 0.0
        %373 = vmatprep.subr.mxu0 0.0
        %374 = vmatpush1.xpose.msra.mxu0 0.0
        %375 = vmatprep.subr.mxu0 0.0
        %376 = vmatpush1.xpose.msra.mxu0 0.0
        %377 = vmatprep.subr.mxu0 0.0
        %378 = vmatpush1.xpose.msra.mxu0 0.0
        %379 = vmatprep.subr.mxu0 0.0
        %380 = vmatpush1.xpose.msra.mxu0 0.0
        %381 = vmatprep.subr.mxu0 0.0
        %382 = vmatpush1.xpose.msra.mxu0 0.0
        %383 = vmatprep.subr.mxu0 0.0
        %384 = vmatpush1.xpose.msra.mxu0 0.0
        %385 = vmatprep.subr.mxu0 0.0
        %386 = vmatpush1.xpose.msra.mxu0 0.0
        %387 = vmatprep.subr.mxu0 0.0
        %388 = vmatpush1.xpose.msra.mxu0 0.0
        %389 = vmatprep.subr.mxu0 0.0
        %390 = vmatpush1.xpose.msra.mxu0 0.0
        %391 = vmatprep.subr.mxu0 0.0
        %392 = vmatpush1.xpose.msra.mxu0 0.0
        %393 = vmatprep.subr.mxu0 0.0
        %394 = vmatpush1.xpose.msra.mxu0 0.0
        %395 = vmatprep.subr.mxu0 0.0
        %396 = vmatpush1.xpose.msra.mxu0 0.0
        %397 = vmatprep.subr.mxu0 0.0
        %398 = vmatpush1.xpose.msra.mxu0 0.0
        %399 = vmatprep.subr.mxu0 0.0
        %400 = vmatpush1.xpose.msra.mxu0 0.0
        %401 = vmatprep.subr.mxu0 0.0
        %402 = vmatpush1.xpose.msra.mxu0 0.0
        %403 = vmatprep.subr.mxu0 0.0
        %404 = vmatpush1.xpose.msra.mxu0 0.0
        %405 = vmatprep.subr.mxu0 0.0
        %406 = vmatpush1.xpose.msra.mxu0 0.0
        %407 = vmatprep.subr.mxu0 0.0
        %408 = vmatpush1.xpose.msra.mxu0 0.0
        %409 = vmatprep.subr.mxu0 0.0
        %410 = vmatpush1.xpose.msra.mxu0 0.0
        %411 = vmatprep.subr.mxu0 0.0
        %412 = vmatpush1.xpose.msra.mxu0 0.0
        %413 = vmatprep.subr.mxu0 0.0
        %414 = vmatpush1.xpose.msra.mxu0 0.0
        %415 = vmatprep.subr.mxu0 0.0
        %416 = vmatpush1.xpose.msra.mxu0 0.0
        %417 = vmatprep.subr.mxu0 0.0
        %418 = vmatpush1.xpose.msra.mxu0 0.0
        %419 = vmatprep.subr.mxu0 0.0
        %420 = vmatpush1.xpose.msra.mxu0 0.0
        %421 = vmatprep.subr.mxu0 0.0
        %422 = vmatpush1.xpose.msra.mxu0 0.0
        %423 = vmatprep.subr.mxu0 0.0
        %424 = vmatpush1.xpose.msra.mxu0 0.0
        %425 = vmatprep.subr.mxu0 0.0
        %426 = vmatpush1.xpose.msra.mxu0 0.0
        %427 = vmatprep.subr.mxu0 0.0
        %428 = vmatpush1.xpose.msra.mxu0 0.0
        %429 = vmatprep.subr.mxu0 0.0
        %430 = vmatpush1.xpose.msra.mxu0 0.0
        %431 = vmatprep.mubr.f32.mxu0 0.0
        %432 = vmatmul.mubr.f32.gmra.mrb[0].mxu0 %v363
        %v433 = vpop.f32.mrb[0].mxu0
        %v434 = vadd.f32 0.0, %v433
        %v435 = vpop.f32.mrb[0].mxu0
        %436 = vdwg.mxu0
        %vm437 = vcmask 64512
        %v438 = vsel %vm437, %v434, -inf
        %439 = vmax.xlane.f32.xlu0 %v438
        %v440 = vpop.xlane.xlu0 %439
        %v441 = vsub.f32 %v434, %v440
        %v442 = vmul.f32 %v441, 1.442695
        %v443 = vpow.pop %v442
        %v444 = vsel %vm437, %v443, 0.0
        %445 = vadd.xlane.f32.xlu0 %v444
        %v446 = vpop.xlane.xlu0 %445
        %v447 = vrcp.pop %v446
        %v448 = vmul.f32 %v443, %v447
        %449 = vrot.lane.b32.xlu0 %v352, 64
        %v450 = vpop.permute.xlu0 %449
        %v453 = vsel %vm437, %v448, 0
        %455 = vmatprep.subr.mxu0 0.0
        %456 = vmatpush1.msra.mxu0 %v450
        %457 = vmatprep.subr.mxu0 0.0
        %458 = vmatpush1.msra.mxu0 0.0
        %459 = vmatprep.subr.mxu0 0.0
        %460 = vmatpush1.msra.mxu0 0.0
        %461 = vmatprep.subr.mxu0 0.0
        %462 = vmatpush1.msra.mxu0 0.0
        %463 = vmatprep.subr.mxu0 0.0
        %464 = vmatpush1.msra.mxu0 0.0
        %465 = vmatprep.subr.mxu0 0.0
        %466 = vmatpush1.msra.mxu0 0.0
        %467 = vmatprep.subr.mxu0 0.0
        %468 = vmatpush1.msra.mxu0 0.0
        %469 = vmatprep.subr.mxu0 0.0
        %470 = vmatpush1.msra.mxu0 0.0
        %471 = vmatprep.subr.mxu0 0.0
        %472 = vmatpush1.msra.mxu0 0.0
        %473 = vmatprep.subr.mxu0 0.0
        %474 = vmatpush1.msra.mxu0 0.0
        %475 = vmatprep.subr.mxu0 0.0
        %476 = vmatpush1.msra.mxu0 0.0
        %477 = vmatprep.subr.mxu0 0.0
        %478 = vmatpush1.msra.mxu0 0.0
        %479 = vmatprep.subr.mxu0 0.0
        %480 = vmatpush1.msra.mxu0 0.0
        %481 = vmatprep.subr.mxu0 0.0
        %482 = vmatpush1.msra.mxu0 0.0
        %483 = vmatprep.subr.mxu0 0.0
        %484 = vmatpush1.msra.mxu0 0.0
        %485 = vmatprep.subr.mxu0 0.0
        %486 = vmatpush1.msra.mxu0 0.0
        %487 = vmatprep.subr.mxu0 0.0
        %488 = vmatpush1.msra.mxu0 0.0
        %489 = vmatprep.subr.mxu0 0.0
        %490 = vmatpush1.msra.mxu0 0.0
        %491 = vmatprep.subr.mxu0 0.0
        %492 = vmatpush1.msra.mxu0 0.0
        %493 = vmatprep.subr.mxu0 0.0
        %494 = vmatpush1.msra.mxu0 0.0
        %495 = vmatprep.subr.mxu0 0.0
        %496 = vmatpush1.msra.mxu0 0.0
        %497 = vmatprep.subr.mxu0 0.0
        %498 = vmatpush1.msra.mxu0 0.0
        %499 = vmatprep.subr.mxu0 0.0
        %500 = vmatpush1.msra.mxu0 0.0
        %501 = vmatprep.subr.mxu0 0.0
        %502 = vmatpush1.msra.mxu0 0.0
        %503 = vmatprep.subr.mxu0 0.0
        %504 = vmatpush1.msra.mxu0 0.0
        %505 = vmatprep.subr.mxu0 0.0
        %506 = vmatpush1.msra.mxu0 0.0
        %507 = vmatprep.subr.mxu0 0.0
        %508 = vmatpush1.msra.mxu0 0.0
        %509 = vmatprep.subr.mxu0 0.0
        %510 = vmatpush1.msra.mxu0 0.0
        %511 = vmatprep.subr.mxu0 0.0
        %512 = vmatpush1.msra.mxu0 0.0
        %513 = vmatprep.subr.mxu0 0.0
        %514 = vmatpush1.msra.mxu0 0.0
        %515 = vmatprep.subr.mxu0 0.0
        %516 = vmatpush1.msra.mxu0 0.0
        %517 = vmatprep.subr.mxu0 0.0
        %518 = vmatpush1.msra.mxu0 0.0
        %519 = vmatprep.mubr.f32.mxu0 0.0
        %520 = vmatmul.mubr.f32.gmra.mrb[0].mxu0 %v453
        %v521 = vpop.f32.mrb[0].mxu0
        %v522 = vadd.f32 0.0, %v521
        %v523 = vpop.f32.mrb[0].mxu0
        %524 = vdwg.mxu0
        %525 = vrot.lane.b32.xlu0 %v352, 124
        %v526 = vpop.permute.xlu0 %525
        %527 = vrot.lane.b32.xlu0 %v352, 92
        %v528 = vpop.permute.xlu0 %527
        %v529 = vsel %vm362, %v526, 0
        %v531 = vsel %vm362, %v528, 0
        %533 = vmatprep.subr.mxu0 0.0
        %534 = vmatpush1.xpose.msra.mxu0 %v531
        %535 = vmatprep.subr.mxu0 0.0
        %536 = vmatpush1.xpose.msra.mxu0 0.0
        %537 = vmatprep.subr.mxu0 0.0
        %538 = vmatpush1.xpose.msra.mxu0 0.0
        %539 = vmatprep.subr.mxu0 0.0
        %540 = vmatpush1.xpose.msra.mxu0 0.0
        %541 = vmatprep.subr.mxu0 0.0
        %542 = vmatpush1.xpose.msra.mxu0 0.0
        %543 = vmatprep.subr.mxu0 0.0
        %544 = vmatpush1.xpose.msra.mxu0 0.0
        %545 = vmatprep.subr.mxu0 0.0
        %546 = vmatpush1.xpose.msra.mxu0 0.0
        %547 = vmatprep.subr.mxu0 0.0
        %548 = vmatpush1.xpose.msra.mxu0 0.0
        %549 = vmatprep.subr.mxu0 0.0
        %550 = vmatpush1.xpose.msra.mxu0 0.0
        %551 = vmatprep.subr.mxu0 0.0
        %552 = vmatpush1.xpose.msra.mxu0 0.0
        %553 = vmatprep.subr.mxu0 0.0
        %554 = vmatpush1.xpose.msra.mxu0 0.0
        %555 = vmatprep.subr.mxu0 0.0
        %556 = vmatpush1.xpose.msra.mxu0 0.0
        %557 = vmatprep.subr.mxu0 0.0
        %558 = vmatpush1.xpose.msra.mxu0 0.0
        %559 = vmatprep.subr.mxu0 0.0
        %560 = vmatpush1.xpose.msra.mxu0 0.0
        %561 = vmatprep.subr.mxu0 0.0
        %562 = vmatpush1.xpose.msra.mxu0 0.0
        %563 = vmatprep.subr.mxu0 0.0
        %564 = vmatpush1.xpose.msra.mxu0 0.0
        %565 = vmatprep.subr.mxu0 0.0
        %566 = vmatpush1.xpose.msra.mxu0 0.0
        %567 = vmatprep.subr.mxu0 0.0
        %568 = vmatpush1.xpose.msra.mxu0 0.0
        %569 = vmatprep.subr.mxu0 0.0
        %570 = vmatpush1.xpose.msra.mxu0 0.0
        %571 = vmatprep.subr.mxu0 0.0
        %572 = vmatpush1.xpose.msra.mxu0 0.0
        %573 = vmatprep.subr.mxu0 0.0
        %574 = vmatpush1.xpose.msra.mxu0 0.0
        %575 = vmatprep.subr.mxu0 0.0
        %576 = vmatpush1.xpose.msra.mxu0 0.0
        %577 = vmatprep.subr.mxu0 0.0
        %578 = vmatpush1.xpose.msra.mxu0 0.0
        %579 = vmatprep.subr.mxu0 0.0
        %580 = vmatpush1.xpose.msra.mxu0 0.0
        %581 = vmatprep.subr.mxu0 0.0
        %582 = vmatpush1.xpose.msra.mxu0 0.0
        %583 = vmatprep.subr.mxu0 0.0
        %584 = vmatpush1.xpose.msra.mxu0 0.0
        %585 = vmatprep.subr.mxu0 0.0
        %586 = vmatpush1.xpose.msra.mxu0 0.0
        %587 = vmatprep.subr.mxu0 0.0
        %588 = vmatpush1.xpose.msra.mxu0 0.0
        %589 = vmatprep.subr.mxu0 0.0
        %590 = vmatpush1.xpose.msra.mxu0 0.0
        %591 = vmatprep.subr.mxu0 0.0
        %592 = vmatpush1.xpose.msra.mxu0 0.0
        %593 = vmatprep.subr.mxu0 0.0
        %594 = vmatpush1.xpose.msra.mxu0 0.0
        %595 = vmatprep.subr.mxu0 0.0
        %596 = vmatpush1.xpose.msra.mxu0 0.0
        %597 = vmatprep.mubr.f32.mxu0 0.0
        %598 = vmatmul.mubr.f32.gmra.mrb[0].mxu0 %v529
        %v599 = vpop.f32.mrb[0].mxu0
        %v600 = vadd.f32 0.0, %v599
        %v601 = vpop.f32.mrb[0].mxu0
        %602 = vdwg.mxu0
        %v603 = vsel %vm437, %v600, -inf
        %604 = vmax.xlane.f32.xlu0 %v603
        %v605 = vpop.xlane.xlu0 %604
        %v606 = vsub.f32 %v600, %v605
        %v607 = vmul.f32 %v606, 1.442695
        %v608 = vpow.pop %v607
        %v609 = vsel %vm437, %v608, 0.0
        %610 = vadd.xlane.f32.xlu0 %v609
        %v611 = vpop.xlane.xlu0 %610
        %v612 = vrcp.pop %v611
        %v613 = vmul.f32 %v608, %v612
        %614 = vrot.lane.b32.xlu0 %v352, 60
        %v615 = vpop.permute.xlu0 %614
        %v618 = vsel %vm437, %v613, 0
        %620 = vmatprep.subr.mxu0 0.0
        %621 = vmatpush1.msra.mxu0 %v615
        %622 = vmatprep.subr.mxu0 0.0
        %623 = vmatpush1.msra.mxu0 0.0
        %624 = vmatprep.subr.mxu0 0.0
        %625 = vmatpush1.msra.mxu0 0.0
        %626 = vmatprep.subr.mxu0 0.0
        %627 = vmatpush1.msra.mxu0 0.0
        %628 = vmatprep.subr.mxu0 0.0
        %629 = vmatpush1.msra.mxu0 0.0
        %630 = vmatprep.subr.mxu0 0.0
        %631 = vmatpush1.msra.mxu0 0.0
        %632 = vmatprep.subr.mxu0 0.0
        %633 = vmatpush1.msra.mxu0 0.0
        %634 = vmatprep.subr.mxu0 0.0
        %635 = vmatpush1.msra.mxu0 0.0
        %636 = vmatprep.subr.mxu0 0.0
        %637 = vmatpush1.msra.mxu0 0.0
        %638 = vmatprep.subr.mxu0 0.0
        %639 = vmatpush1.msra.mxu0 0.0
        %640 = vmatprep.subr.mxu0 0.0
        %641 = vmatpush1.msra.mxu0 0.0
        %642 = vmatprep.subr.mxu0 0.0
        %643 = vmatpush1.msra.mxu0 0.0
        %644 = vmatprep.subr.mxu0 0.0
        %645 = vmatpush1.msra.mxu0 0.0
        %646 = vmatprep.subr.mxu0 0.0
        %647 = vmatpush1.msra.mxu0 0.0
        %648 = vmatprep.subr.mxu0 0.0
        %649 = vmatpush1.msra.mxu0 0.0
        %650 = vmatprep.subr.mxu0 0.0
        %651 = vmatpush1.msra.mxu0 0.0
        %652 = vmatprep.subr.mxu0 0.0
        %653 = vmatpush1.msra.mxu0 0.0
        %654 = vmatprep.subr.mxu0 0.0
        %655 = vmatpush1.msra.mxu0 0.0
        %656 = vmatprep.subr.mxu0 0.0
        %657 = vmatpush1.msra.mxu0 0.0
        %658 = vmatprep.subr.mxu0 0.0
        %659 = vmatpush1.msra.mxu0 0.0
        %660 = vmatprep.subr.mxu0 0.0
        %661 = vmatpush1.msra.mxu0 0.0
        %662 = vmatprep.subr.mxu0 0.0
        %663 = vmatpush1.msra.mxu0 0.0
        %664 = vmatprep.subr.mxu0 0.0
        %665 = vmatpush1.msra.mxu0 0.0
        %666 = vmatprep.subr.mxu0 0.0
        %667 = vmatpush1.msra.mxu0 0.0
        %668 = vmatprep.subr.mxu0 0.0
        %669 = vmatpush1.msra.mxu0 0.0
        %670 = vmatprep.subr.mxu0 0.0
        %671 = vmatpush1.msra.mxu0 0.0
        %672 = vmatprep.subr.mxu0 0.0
        %673 = vmatpush1.msra.mxu0 0.0
        %674 = vmatprep.subr.mxu0 0.0
        %675 = vmatpush1.msra.mxu0 0.0
        %676 = vmatprep.subr.mxu0 0.0
        %677 = vmatpush1.msra.mxu0 0.0
        %678 = vmatprep.subr.mxu0 0.0
        %679 = vmatpush1.msra.mxu0 0.0
        %680 = vmatprep.subr.mxu0 0.0
        %681 = vmatpush1.msra.mxu0 0.0
        %682 = vmatprep.subr.mxu0 0.0
        %683 = vmatpush1.msra.mxu0 0.0
        %684 = vmatprep.mubr.f32.mxu0 0.0
        %685 = vmatmul.mubr.f32.gmra.mrb[0].mxu0 %v618
        %v686 = vpop.f32.mrb[0].mxu0
        %v687 = vadd.f32 0.0, %v686
        %v688 = vpop.f32.mrb[0].mxu0
        %689 = vdwg.mxu0
        %v691 = vrot.slane %v355, 4
        %v693 = vsel %vm362, %v687, 0
        %vm695 = vcmask 1043456
        %v696 = vsel %vm695, %v691, 0
        %698 = vmatprep.subr.mxu0 0.0
        %699 = vmatpush1.msra.mxu0 %v696
        %700 = vmatprep.subr.mxu0 0.0
        %701 = vmatpush1.msra.mxu0 0.0
        %702 = vmatprep.subr.mxu0 0.0
        %703 = vmatpush1.msra.mxu0 0.0
        %704 = vmatprep.subr.mxu0 0.0
        %705 = vmatpush1.msra.mxu0 0.0
        %706 = vmatprep.subr.mxu0 0.0
        %707 = vmatpush1.msra.mxu0 0.0
        %708 = vmatprep.subr.mxu0 0.0
        %709 = vmatpush1.msra.mxu0 0.0
        %710 = vmatprep.subr.mxu0 0.0
        %711 = vmatpush1.msra.mxu0 0.0
        %712 = vmatprep.subr.mxu0 0.0
        %713 = vmatpush1.msra.mxu0 0.0
        %714 = vmatprep.subr.mxu0 0.0
        %715 = vmatpush1.msra.mxu0 0.0
        %716 = vmatprep.subr.mxu0 0.0
        %717 = vmatpush1.msra.mxu0 0.0
        %718 = vmatprep.subr.mxu0 0.0
        %719 = vmatpush1.msra.mxu0 0.0
        %720 = vmatprep.subr.mxu0 0.0
        %721 = vmatpush1.msra.mxu0 0.0
        %722 = vmatprep.subr.mxu0 0.0
        %723 = vmatpush1.msra.mxu0 0.0
        %724 = vmatprep.subr.mxu0 0.0
        %725 = vmatpush1.msra.mxu0 0.0
        %726 = vmatprep.subr.mxu0 0.0
        %727 = vmatpush1.msra.mxu0 0.0
        %728 = vmatprep.subr.mxu0 0.0
        %729 = vmatpush1.msra.mxu0 0.0
        %730 = vmatprep.subr.mxu0 0.0
        %731 = vmatpush1.msra.mxu0 0.0
        %732 = vmatprep.subr.mxu0 0.0
        %733 = vmatpush1.msra.mxu0 0.0
        %734 = vmatprep.subr.mxu0 0.0
        %735 = vmatpush1.msra.mxu0 0.0
        %736 = vmatprep.subr.mxu0 0.0
        %737 = vmatpush1.msra.mxu0 0.0
        %738 = vmatprep.subr.mxu0 0.0
        %739 = vmatpush1.msra.mxu0 0.0
        %740 = vmatprep.subr.mxu0 0.0
        %741 = vmatpush1.msra.mxu0 0.0
        %742 = vmatprep.subr.mxu0 0.0
        %743 = vmatpush1.msra.mxu0 0.0
        %744 = vmatprep.subr.mxu0 0.0
        %745 = vmatpush1.msra.mxu0 0.0
        %746 = vmatprep.subr.mxu0 0.0
        %747 = vmatpush1.msra.mxu0 0.0
        %748 = vmatprep.subr.mxu0 0.0
        %749 = vmatpush1.msra.mxu0 0.0
        %750 = vmatprep.subr.mxu0 0.0
        %751 = vmatpush1.msra.mxu0 0.0
        %752 = vmatprep.subr.mxu0 0.0
        %753 = vmatpush1.msra.mxu0 0.0
        %754 = vmatprep.subr.mxu0 0.0
        %755 = vmatpush1.msra.mxu0 0.0
        %756 = vmatprep.subr.mxu0 0.0
        %757 = vmatpush1.msra.mxu0 0.0
        %758 = vmatprep.subr.mxu0 0.0
        %759 = vmatpush1.msra.mxu0 0.0
        %760 = vmatprep.subr.mxu0 0.0
        %761 = vmatpush1.msra.mxu0 0.0
        %762 = vmatprep.mubr.f32.mxu0 0.0
        %763 = vmatmul.mubr.f32.gmra.mrb[0].mxu0 %v693
        %v764 = vpop.f32.mrb[0].mxu0
        %v765 = vadd.f32 0.0, %v764
        %v766 = vpop.f32.mrb[0].mxu0
        %767 = vdwg.mxu0
        %v769 = vsel %vm362, %v522, 0
        %v771 = vsel %vm695, %v355, 0
        %773 = vmatprep.subr.mxu0 0.0
        %774 = vmatpush1.msra.mxu0 %v771
        %775 = vmatprep.subr.mxu0 0.0
        %776 = vmatpush1.msra.mxu0 0.0
        %777 = vmatprep.subr.mxu0 0.0
        %778 = vmatpush1.msra.mxu0 0.0
        %779 = vmatprep.subr.mxu0 0.0
        %780 = vmatpush1.msra.mxu0 0.0
        %781 = vmatprep.subr.mxu0 0.0
        %782 = vmatpush1.msra.mxu0 0.0
        %783 = vmatprep.subr.mxu0 0.0
        %784 = vmatpush1.msra.mxu0 0.0
        %785 = vmatprep.subr.mxu0 0.0
        %786 = vmatpush1.msra.mxu0 0.0
        %787 = vmatprep.subr.mxu0 0.0
        %788 = vmatpush1.msra.mxu0 0.0
        %789 = vmatprep.subr.mxu0 0.0
        %790 = vmatpush1.msra.mxu0 0.0
        %791 = vmatprep.subr.mxu0 0.0
        %792 = vmatpush1.msra.mxu0 0.0
        %793 = vmatprep.subr.mxu0 0.0
        %794 = vmatpush1.msra.mxu0 0.0
        %795 = vmatprep.subr.mxu0 0.0
        %796 = vmatpush1.msra.mxu0 0.0
        %797 = vmatprep.subr.mxu0 0.0
        %798 = vmatpush1.msra.mxu0 0.0
        %799 = vmatprep.subr.mxu0 0.0
        %800 = vmatpush1.msra.mxu0 0.0
        %801 = vmatprep.subr.mxu0 0.0
        %802 = vmatpush1.msra.mxu0 0.0
        %803 = vmatprep.subr.mxu0 0.0
        %804 = vmatpush1.msra.mxu0 0.0
        %805 = vmatprep.subr.mxu0 0.0
        %806 = vmatpush1.msra.mxu0 0.0
        %807 = vmatprep.subr.mxu0 0.0
        %808 = vmatpush1.msra.mxu0 0.0
        %809 = vmatprep.subr.mxu0 0.0
        %810 = vmatpush1.msra.mxu0 0.0
        %811 = vmatprep.subr.mxu0 0.0
        %812 = vmatpush1.msra.mxu0 0.0
        %813 = vmatprep.subr.mxu0 0.0
        %814 = vmatpush1.msra.mxu0 0.0
        %815 = vmatprep.subr.mxu0 0.0
        %816 = vmatpush1.msra.mxu0 0.0
        %817 = vmatprep.subr.mxu0 0.0
        %818 = vmatpush1.msra.mxu0 0.0
        %819 = vmatprep.subr.mxu0 0.0
        %820 = vmatpush1.msra.mxu0 0.0
        %821 = vmatprep.subr.mxu0 0.0
        %822 = vmatpush1.msra.mxu0 0.0
        %823 = vmatprep.subr.mxu0 0.0
        %824 = vmatpush1.msra.mxu0 0.0
        %825 = vmatprep.subr.mxu0 0.0
        %826 = vmatpush1.msra.mxu0 0.0
        %827 = vmatprep.subr.mxu0 0.0
        %828 = vmatpush1.msra.mxu0 0.0
        %829 = vmatprep.subr.mxu0 0.0
        %830 = vmatpush1.msra.mxu0 0.0
        %831 = vmatprep.subr.mxu0 0.0
        %832 = vmatpush1.msra.mxu0 0.0
        %833 = vmatprep.subr.mxu0 0.0
        %834 = vmatpush1.msra.mxu0 0.0
        %835 = vmatprep.subr.mxu0 0.0
        %836 = vmatpush1.msra.mxu0 0.0
        %837 = vmatprep.mubr.f32.mxu0 0.0
        %838 = vmatmul.mubr.f32.gmra.mrb[0].mxu0 %v769
        %v839 = vpop.f32.mrb[0].mxu0
        %v840 = vadd.f32 %v765, %v839
        %v841 = vpop.f32.mrb[0].mxu0
        %842 = vdwg.mxu0
        %843 = vrot.lane.b32.xlu0 %v352, 120
        %v844 = vpop.permute.xlu0 %843
        %845 = vrot.lane.b32.xlu0 %v352, 88
        %v846 = vpop.permute.xlu0 %845
        %v847 = vsel %vm362, %v844, 0
        %v849 = vsel %vm362, %v846, 0
        %851 = vmatprep.subr.mxu0 0.0
        %852 = vmatpush1.xpose.msra.mxu0 %v849
        %853 = vmatprep.subr.mxu0 0.0
        %854 = vmatpush1.xpose.msra.mxu0 0.0
        %855 = vmatprep.subr.mxu0 0.0
        %856 = vmatpush1.xpose.msra.mxu0 0.0
        %857 = vmatprep.subr.mxu0 0.0
        %858 = vmatpush1.xpose.msra.mxu0 0.0
        %859 = vmatprep.subr.mxu0 0.0
        %860 = vmatpush1.xpose.msra.mxu0 0.0
        %861 = vmatprep.subr.mxu0 0.0
        %862 = vmatpush1.xpose.msra.mxu0 0.0
        %863 = vmatprep.subr.mxu0 0.0
        %864 = vmatpush1.xpose.msra.mxu0 0.0
        %865 = vmatprep.subr.mxu0 0.0
        %866 = vmatpush1.xpose.msra.mxu0 0.0
        %867 = vmatprep.subr.mxu0 0.0
        %868 = vmatpush1.xpose.msra.mxu0 0.0
        %869 = vmatprep.subr.mxu0 0.0
        %870 = vmatpush1.xpose.msra.mxu0 0.0
        %871 = vmatprep.subr.mxu0 0.0
        %872 = vmatpush1.xpose.msra.mxu0 0.0
        %873 = vmatprep.subr.mxu0 0.0
        %874 = vmatpush1.xpose.msra.mxu0 0.0
        %875 = vmatprep.subr.mxu0 0.0
        %876 = vmatpush1.xpose.msra.mxu0 0.0
        %877 = vmatprep.subr.mxu0 0.0
        %878 = vmatpush1.xpose.msra.mxu0 0.0
        %879 = vmatprep.subr.mxu0 0.0
        %880 = vmatpush1.xpose.msra.mxu0 0.0
        %881 = vmatprep.subr.mxu0 0.0
        %882 = vmatpush1.xpose.msra.mxu0 0.0
        %883 = vmatprep.subr.mxu0 0.0
        %884 = vmatpush1.xpose.msra.mxu0 0.0
        %885 = vmatprep.subr.mxu0 0.0
        %886 = vmatpush1.xpose.msra.mxu0 0.0
        %887 = vmatprep.subr.mxu0 0.0
        %888 = vmatpush1.xpose.msra.mxu0 0.0
        %889 = vmatprep.subr.mxu0 0.0
        %890 = vmatpush1.xpose.msra.mxu0 0.0
        %891 = vmatprep.subr.mxu0 0.0
        %892 = vmatpush1.xpose.msra.mxu0 0.0
        %893 = vmatprep.subr.mxu0 0.0
        %894 = vmatpush1.xpose.msra.mxu0 0.0
        %895 = vmatprep.subr.mxu0 0.0
        %896 = vmatpush1.xpose.msra.mxu0 0.0
        %897 = vmatprep.subr.mxu0 0.0
        %898 = vmatpush1.xpose.msra.mxu0 0.0
        %899 = vmatprep.subr.mxu0 0.0
        %900 = vmatpush1.xpose.msra.mxu0 0.0
        %901 = vmatprep.subr.mxu0 0.0
        %902 = vmatpush1.xpose.msra.mxu0 0.0
        %903 = vmatprep.subr.mxu0 0.0
        %904 = vmatpush1.xpose.msra.mxu0 0.0
        %905 = vmatprep.subr.mxu0 0.0
        %906 = vmatpush1.xpose.msra.mxu0 0.0
        %907 = vmatprep.subr.mxu0 0.0
        %908 = vmatpush1.xpose.msra.mxu0 0.0
        %909 = vmatprep.subr.mxu0 0.0
        %910 = vmatpush1.xpose.msra.mxu0 0.0
        %911 = vmatprep.subr.mxu0 0.0
        %912 = vmatpush1.xpose.msra.mxu0 0.0
        %913 = vmatprep.subr.mxu0 0.0
        %914 = vmatpush1.xpose.msra.mxu0 0.0
        %915 = vmatprep.mubr.f32.mxu0 0.0
        %916 = vmatmul.mubr.f32.gmra.mrb[0].mxu0 %v847
        %v917 = vpop.f32.mrb[0].mxu0
        %v918 = vadd.f32 0.0, %v917
        %v919 = vpop.f32.mrb[0].mxu0
        %920 = vdwg.mxu0
        %v921 = vsel %vm437, %v918, -inf
        %922 = vmax.xlane.f32.xlu0 %v921
        %v923 = vpop.xlane.xlu0 %922
        %v924 = vsub.f32 %v918, %v923
        %v925 = vmul.f32 %v924, 1.442695
        %v926 = vpow.pop %v925
        %v927 = vsel %vm437, %v926, 0.0
        %928 = vadd.xlane.f32.xlu0 %v927
        %v929 = vpop.xlane.xlu0 %928
        %v930 = vrcp.pop %v929
        %v931 = vmul.f32 %v926, %v930
        %932 = vrot.lane.b32.xlu0 %v352, 56
        %v933 = vpop.permute.xlu0 %932
        %v936 = vsel %vm437, %v931, 0
        %938 = vmatprep.subr.mxu0 0.0
        %939 = vmatpush1.msra.mxu0 %v933
        %940 = vmatprep.subr.mxu0 0.0
        %941 = vmatpush1.msra.mxu0 0.0
        %942 = vmatprep.subr.mxu0 0.0
        %943 = vmatpush1.msra.mxu0 0.0
        %944 = vmatprep.subr.mxu0 0.0
        %945 = vmatpush1.msra.mxu0 0.0
        %946 = vmatprep.subr.mxu0 0.0
        %947 = vmatpush1.msra.mxu0 0.0
        %948 = vmatprep.subr.mxu0 0.0
        %949 = vmatpush1.msra.mxu0 0.0
        %950 = vmatprep.subr.mxu0 0.0
        %951 = vmatpush1.msra.mxu0 0.0
        %952 = vmatprep.subr.mxu0 0.0
        %953 = vmatpush1.msra.mxu0 0.0
        %954 = vmatprep.subr.mxu0 0.0
        %955 = vmatpush1.msra.mxu0 0.0
        %956 = vmatprep.subr.mxu0 0.0
        %957 = vmatpush1.msra.mxu0 0.0
        %958 = vmatprep.subr.mxu0 0.0
        %959 = vmatpush1.msra.mxu0 0.0
        %960 = vmatprep.subr.mxu0 0.0
        %961 = vmatpush1.msra.mxu0 0.0
        %962 = vmatprep.subr.mxu0 0.0
        %963 = vmatpush1.msra.mxu0 0.0
        %964 = vmatprep.subr.mxu0 0.0
        %965 = vmatpush1.msra.mxu0 0.0
        %966 = vmatprep.subr.mxu0 0.0
        %967 = vmatpush1.msra.mxu0 0.0
        %968 = vmatprep.subr.mxu0 0.0
        %969 = vmatpush1.msra.mxu0 0.0
        %970 = vmatprep.subr.mxu0 0.0
        %971 = vmatpush1.msra.mxu0 0.0
        %972 = vmatprep.subr.mxu0 0.0
        %973 = vmatpush1.msra.mxu0 0.0
        %974 = vmatprep.subr.mxu0 0.0
        %975 = vmatpush1.msra.mxu0 0.0
        %976 = vmatprep.subr.mxu0 0.0
        %977 = vmatpush1.msra.mxu0 0.0
        %978 = vmatprep.subr.mxu0 0.0
        %979 = vmatpush1.msra.mxu0 0.0
        %980 = vmatprep.subr.mxu0 0.0
        %981 = vmatpush1.msra.mxu0 0.0
        %982 = vmatprep.subr.mxu0 0.0
        %983 = vmatpush1.msra.mxu0 0.0
        %984 = vmatprep.subr.mxu0 0.0
        %985 = vmatpush1.msra.mxu0 0.0
        %986 = vmatprep.subr.mxu0 0.0
        %987 = vmatpush1.msra.mxu0 0.0
        %988 = vmatprep.subr.mxu0 0.0
        %989 = vmatpush1.msra.mxu0 0.0
        %990 = vmatprep.subr.mxu0 0.0
        %991 = vmatpush1.msra.mxu0 0.0
        %992 = vmatprep.subr.mxu0 0.0
        %993 = vmatpush1.msra.mxu0 0.0
        %994 = vmatprep.subr.mxu0 0.0
        %995 = vmatpush1.msra.mxu0 0.0
        %996 = vmatprep.subr.mxu0 0.0
        %997 = vmatpush1.msra.mxu0 0.0
        %998 = vmatprep.subr.mxu0 0.0
        %999 = vmatpush1.msra.mxu0 0.0
        %1000 = vmatprep.subr.mxu0 0.0
        %1001 = vmatpush1.msra.mxu0 0.0
        %1002 = vmatprep.mubr.f32.mxu0 0.0
        %1003 = vmatmul.mubr.f32.gmra.mrb[0].mxu0 %v936
        %v1004 = vpop.f32.mrb[0].mxu0
        %v1005 = vadd.f32 0.0, %v1004
        %v1006 = vpop.f32.mrb[0].mxu0
        %1007 = vdwg.mxu0
        %v1009 = vsel %vm362, %v1005, 0
        %v1012 = vsel %vm695, %v356, 0
        %1014 = vmatprep.subr.mxu0 0.0
        %1015 = vmatpush1.msra.mxu0 %v1012
        %1016 = vmatprep.subr.mxu0 0.0
        %1017 = vmatpush1.msra.mxu0 0.0
        %1018 = vmatprep.subr.mxu0 0.0
        %1019 = vmatpush1.msra.mxu0 0.0
        %1020 = vmatprep.subr.mxu0 0.0
        %1021 = vmatpush1.msra.mxu0 0.0
        %1022 = vmatprep.subr.mxu0 0.0
        %1023 = vmatpush1.msra.mxu0 0.0
        %1024 = vmatprep.subr.mxu0 0.0
        %1025 = vmatpush1.msra.mxu0 0.0
        %1026 = vmatprep.subr.mxu0 0.0
        %1027 = vmatpush1.msra.mxu0 0.0
        %1028 = vmatprep.subr.mxu0 0.0
        %1029 = vmatpush1.msra.mxu0 0.0
        %1030 = vmatprep.subr.mxu0 0.0
        %1031 = vmatpush1.msra.mxu0 0.0
        %1032 = vmatprep.subr.mxu0 0.0
        %1033 = vmatpush1.msra.mxu0 0.0
        %1034 = vmatprep.subr.mxu0 0.0
        %1035 = vmatpush1.msra.mxu0 0.0
        %1036 = vmatprep.subr.mxu0 0.0
        %1037 = vmatpush1.msra.mxu0 0.0
        %1038 = vmatprep.subr.mxu0 0.0
        %1039 = vmatpush1.msra.mxu0 0.0
        %1040 = vmatprep.subr.mxu0 0.0
        %1041 = vmatpush1.msra.mxu0 0.0
        %1042 = vmatprep.subr.mxu0 0.0
        %1043 = vmatpush1.msra.mxu0 0.0
        %1044 = vmatprep.subr.mxu0 0.0
        %1045 = vmatpush1.msra.mxu0 0.0
        %1046 = vmatprep.subr.mxu0 0.0
        %1047 = vmatpush1.msra.mxu0 0.0
        %1048 = vmatprep.subr.mxu0 0.0
        %1049 = vmatpush1.msra.mxu0 0.0
        %1050 = vmatprep.subr.mxu0 0.0
        %1051 = vmatpush1.msra.mxu0 0.0
        %1052 = vmatprep.subr.mxu0 0.0
        %1053 = vmatpush1.msra.mxu0 0.0
        %1054 = vmatprep.subr.mxu0 0.0
        %1055 = vmatpush1.msra.mxu0 0.0
        %1056 = vmatprep.subr.mxu0 0.0
        %1057 = vmatpush1.msra.mxu0 0.0
        %1058 = vmatprep.subr.mxu0 0.0
        %1059 = vmatpush1.msra.mxu0 0.0
        %1060 = vmatprep.subr.mxu0 0.0
        %1061 = vmatpush1.msra.mxu0 0.0
        %1062 = vmatprep.subr.mxu0 0.0
        %1063 = vmatpush1.msra.mxu0 0.0
        %1064 = vmatprep.subr.mxu0 0.0
        %1065 = vmatpush1.msra.mxu0 0.0
        %1066 = vmatprep.subr.mxu0 0.0
        %1067 = vmatpush1.msra.mxu0 0.0
        %1068 = vmatprep.subr.mxu0 0.0
        %1069 = vmatpush1.msra.mxu0 0.0
        %1070 = vmatprep.subr.mxu0 0.0
        %1071 = vmatpush1.msra.mxu0 0.0
        %1072 = vmatprep.subr.mxu0 0.0
        %1073 = vmatpush1.msra.mxu0 0.0
        %1074 = vmatprep.subr.mxu0 0.0
        %1075 = vmatpush1.msra.mxu0 0.0
        %1076 = vmatprep.subr.mxu0 0.0
        %1077 = vmatpush1.msra.mxu0 0.0
        %1078 = vmatprep.mubr.f32.mxu0 0.0
        %1079 = vmatmul.mubr.f32.gmra.mrb[0].mxu0 %v1009
        %v1080 = vpop.f32.mrb[0].mxu0
        %v1081 = vadd.f32 0.0, %v1080
        %v1082 = vpop.f32.mrb[0].mxu0
        %1083 = vdwg.mxu0
        %v1084 = vadd.f32 %v840, %v1081
        %1085 = vrot.lane.b32.xlu0 %v352, 116
        %v1086 = vpop.permute.xlu0 %1085
        %1087 = vrot.lane.b32.xlu0 %v352, 84
        %v1088 = vpop.permute.xlu0 %1087
        %v1089 = vsel %vm362, %v1086, 0
        %v1091 = vsel %vm362, %v1088, 0
        %1093 = vmatprep.subr.mxu0 0.0
        %1094 = vmatpush1.xpose.msra.mxu0 %v1091
        %1095 = vmatprep.subr.mxu0 0.0
        %1096 = vmatpush1.xpose.msra.mxu0 0.0
        %1097 = vmatprep.subr.mxu0 0.0
        %1098 = vmatpush1.xpose.msra.mxu0 0.0
        %1099 = vmatprep.subr.mxu0 0.0
        %1100 = vmatpush1.xpose.msra.mxu0 0.0
        %1101 = vmatprep.subr.mxu0 0.0
        %1102 = vmatpush1.xpose.msra.mxu0 0.0
        %1103 = vmatprep.subr.mxu0 0.0
        %1104 = vmatpush1.xpose.msra.mxu0 0.0
        %1105 = vmatprep.subr.mxu0 0.0
        %1106 = vmatpush1.xpose.msra.mxu0 0.0
        %1107 = vmatprep.subr.mxu0 0.0
        %1108 = vmatpush1.xpose.msra.mxu0 0.0
        %1109 = vmatprep.subr.mxu0 0.0
        %1110 = vmatpush1.xpose.msra.mxu0 0.0
        %1111 = vmatprep.subr.mxu0 0.0
        %1112 = vmatpush1.xpose.msra.mxu0 0.0
        %1113 = vmatprep.subr.mxu0 0.0
        %1114 = vmatpush1.xpose.msra.mxu0 0.0
        %1115 = vmatprep.subr.mxu0 0.0
        %1116 = vmatpush1.xpose.msra.mxu0 0.0
        %1117 = vmatprep.subr.mxu0 0.0
        %1118 = vmatpush1.xpose.msra.mxu0 0.0
        %1119 = vmatprep.subr.mxu0 0.0
        %1120 = vmatpush1.xpose.msra.mxu0 0.0
        %1121 = vmatprep.subr.mxu0 0.0
        %1122 = vmatpush1.xpose.msra.mxu0 0.0
        %1123 = vmatprep.subr.mxu0 0.0
        %1124 = vmatpush1.xpose.msra.mxu0 0.0
        %1125 = vmatprep.subr.mxu0 0.0
        %1126 = vmatpush1.xpose.msra.mxu0 0.0
        %1127 = vmatprep.subr.mxu0 0.0
        %1128 = vmatpush1.xpose.msra.mxu0 0.0
        %1129 = vmatprep.subr.mxu0 0.0
        %1130 = vmatpush1.xpose.msra.mxu0 0.0
        %1131 = vmatprep.subr.mxu0 0.0
        %1132 = vmatpush1.xpose.msra.mxu0 0.0
        %1133 = vmatprep.subr.mxu0 0.0
        %1134 = vmatpush1.xpose.msra.mxu0 0.0
        %1135 = vmatprep.subr.mxu0 0.0
        %1136 = vmatpush1.xpose.msra.mxu0 0.0
        %1137 = vmatprep.subr.mxu0 0.0
        %1138 = vmatpush1.xpose.msra.mxu0 0.0
        %1139 = vmatprep.subr.mxu0 0.0
        %1140 = vmatpush1.xpose.msra.mxu0 0.0
        %1141 = vmatprep.subr.mxu0 0.0
        %1142 = vmatpush1.xpose.msra.mxu0 0.0
        %1143 = vmatprep.subr.mxu0 0.0
        %1144 = vmatpush1.xpose.msra.mxu0 0.0
        %1145 = vmatprep.subr.mxu0 0.0
        %1146 = vmatpush1.xpose.msra.mxu0 0.0
        %1147 = vmatprep.subr.mxu0 0.0
        %1148 = vmatpush1.xpose.msra.mxu0 0.0
        %1149 = vmatprep.subr.mxu0 0.0
        %1150 = vmatpush1.xpose.msra.mxu0 0.0
        %1151 = vmatprep.subr.mxu0 0.0
        %1152 = vmatpush1.xpose.msra.mxu0 0.0
        %1153 = vmatprep.subr.mxu0 0.0
        %1154 = vmatpush1.xpose.msra.mxu0 0.0
        %1155 = vmatprep.subr.mxu0 0.0
        %1156 = vmatpush1.xpose.msra.mxu0 0.0
        %1157 = vmatprep.mubr.f32.mxu0 0.0
        %1158 = vmatmul.mubr.f32.gmra.mrb[0].mxu0 %v1089
        %v1159 = vpop.f32.mrb[0].mxu0
        %v1160 = vadd.f32 0.0, %v1159
        %v1161 = vpop.f32.mrb[0].mxu0
        %1162 = vdwg.mxu0
        %v1163 = vsel %vm437, %v1160, -inf
        %1164 = vmax.xlane.f32.xlu0 %v1163
        %v1165 = vpop.xlane.xlu0 %1164
        %v1166 = vsub.f32 %v1160, %v1165
        %v1167 = vmul.f32 %v1166, 1.442695
        %v1168 = vpow.pop %v1167
        %v1169 = vsel %vm437, %v1168, 0.0
        %1170 = vadd.xlane.f32.xlu0 %v1169
        %v1171 = vpop.xlane.xlu0 %1170
        %v1172 = vrcp.pop %v1171
        %v1173 = vmul.f32 %v1168, %v1172
        %1174 = vrot.lane.b32.xlu0 %v352, 52
        %v1175 = vpop.permute.xlu0 %1174
        %v1178 = vsel %vm437, %v1173, 0
        %1180 = vmatprep.subr.mxu0 0.0
        %1181 = vmatpush1.msra.mxu0 %v1175
        %1182 = vmatprep.subr.mxu0 0.0
        %1183 = vmatpush1.msra.mxu0 0.0
        %1184 = vmatprep.subr.mxu0 0.0
        %1185 = vmatpush1.msra.mxu0 0.0
        %1186 = vmatprep.subr.mxu0 0.0
        %1187 = vmatpush1.msra.mxu0 0.0
        %1188 = vmatprep.subr.mxu0 0.0
        %1189 = vmatpush1.msra.mxu0 0.0
        %1190 = vmatprep.subr.mxu0 0.0
        %1191 = vmatpush1.msra.mxu0 0.0
        %1192 = vmatprep.subr.mxu0 0.0
        %1193 = vmatpush1.msra.mxu0 0.0
        %1194 = vmatprep.subr.mxu0 0.0
        %1195 = vmatpush1.msra.mxu0 0.0
        %1196 = vmatprep.subr.mxu0 0.0
        %1197 = vmatpush1.msra.mxu0 0.0
        %1198 = vmatprep.subr.mxu0 0.0
        %1199 = vmatpush1.msra.mxu0 0.0
        %1200 = vmatprep.subr.mxu0 0.0
        %1201 = vmatpush1.msra.mxu0 0.0
        %1202 = vmatprep.subr.mxu0 0.0
        %1203 = vmatpush1.msra.mxu0 0.0
        %1204 = vmatprep.subr.mxu0 0.0
        %1205 = vmatpush1.msra.mxu0 0.0
        %1206 = vmatprep.subr.mxu0 0.0
        %1207 = vmatpush1.msra.mxu0 0.0
        %1208 = vmatprep.subr.mxu0 0.0
        %1209 = vmatpush1.msra.mxu0 0.0
        %1210 = vmatprep.subr.mxu0 0.0
        %1211 = vmatpush1.msra.mxu0 0.0
        %1212 = vmatprep.subr.mxu0 0.0
        %1213 = vmatpush1.msra.mxu0 0.0
        %1214 = vmatprep.subr.mxu0 0.0
        %1215 = vmatpush1.msra.mxu0 0.0
        %1216 = vmatprep.subr.mxu0 0.0
        %1217 = vmatpush1.msra.mxu0 0.0
        %1218 = vmatprep.subr.mxu0 0.0
        %1219 = vmatpush1.msra.mxu0 0.0
        %1220 = vmatprep.subr.mxu0 0.0
        %1221 = vmatpush1.msra.mxu0 0.0
        %1222 = vmatprep.subr.mxu0 0.0
        %1223 = vmatpush1.msra.mxu0 0.0
        %1224 = vmatprep.subr.mxu0 0.0
        %1225 = vmatpush1.msra.mxu0 0.0
        %1226 = vmatprep.subr.mxu0 0.0
        %1227 = vmatpush1.msra.mxu0 0.0
        %1228 = vmatprep.subr.mxu0 0.0
        %1229 = vmatpush1.msra.mxu0 0.0
        %1230 = vmatprep.subr.mxu0 0.0
        %1231 = vmatpush1.msra.mxu0 0.0
        %1232 = vmatprep.subr.mxu0 0.0
        %1233 = vmatpush1.msra.mxu0 0.0
        %1234 = vmatprep.subr.mxu0 0.0
        %1235 = vmatpush1.msra.mxu0 0.0
        %1236 = vmatprep.subr.mxu0 0.0
        %1237 = vmatpush1.msra.mxu0 0.0
        %1238 = vmatprep.subr.mxu0 0.0
        %1239 = vmatpush1.msra.mxu0 0.0
        %1240 = vmatprep.subr.mxu0 0.0
        %1241 = vmatpush1.msra.mxu0 0.0
        %1242 = vmatprep.subr.mxu0 0.0
        %1243 = vmatpush1.msra.mxu0 0.0
        %1244 = vmatprep.mubr.f32.mxu0 0.0
        %1245 = vmatmul.mubr.f32.gmra.mrb[0].mxu0 %v1178
        %v1246 = vpop.f32.mrb[0].mxu0
        %v1247 = vadd.f32 0.0, %v1246
        %v1248 = vpop.f32.mrb[0].mxu0
        %1249 = vdwg.mxu0
        %v1250 = vrot.slane %v356, 4
        %v1252 = vsel %vm362, %v1247, 0
        %v1254 = vsel %vm695, %v1250, 0
        %1256 = vmatprep.subr.mxu0 0.0
        %1257 = vmatpush1.msra.mxu0 %v1254
        %1258 = vmatprep.subr.mxu0 0.0
        %1259 = vmatpush1.msra.mxu0 0.0
        %1260 = vmatprep.subr.mxu0 0.0
        %1261 = vmatpush1.msra.mxu0 0.0
        %1262 = vmatprep.subr.mxu0 0.0
        %1263 = vmatpush1.msra.mxu0 0.0
        %1264 = vmatprep.subr.mxu0 0.0
        %1265 = vmatpush1.msra.mxu0 0.0
        %1266 = vmatprep.subr.mxu0 0.0
        %1267 = vmatpush1.msra.mxu0 0.0
        %1268 = vmatprep.subr.mxu0 0.0
        %1269 = vmatpush1.msra.mxu0 0.0
        %1270 = vmatprep.subr.mxu0 0.0
        %1271 = vmatpush1.msra.mxu0 0.0
        %1272 = vmatprep.subr.mxu0 0.0
        %1273 = vmatpush1.msra.mxu0 0.0
        %1274 = vmatprep.subr.mxu0 0.0
        %1275 = vmatpush1.msra.mxu0 0.0
        %1276 = vmatprep.subr.mxu0 0.0
        %1277 = vmatpush1.msra.mxu0 0.0
        %1278 = vmatprep.subr.mxu0 0.0
        %1279 = vmatpush1.msra.mxu0 0.0
        %1280 = vmatprep.subr.mxu0 0.0
        %1281 = vmatpush1.msra.mxu0 0.0
        %1282 = vmatprep.subr.mxu0 0.0
        %1283 = vmatpush1.msra.mxu0 0.0
        %1284 = vmatprep.subr.mxu0 0.0
        %1285 = vmatpush1.msra.mxu0 0.0
        %1286 = vmatprep.subr.mxu0 0.0
        %1287 = vmatpush1.msra.mxu0 0.0
        %1288 = vmatprep.subr.mxu0 0.0
        %1289 = vmatpush1.msra.mxu0 0.0
        %1290 = vmatprep.subr.mxu0 0.0
        %1291 = vmatpush1.msra.mxu0 0.0
        %1292 = vmatprep.subr.mxu0 0.0
        %1293 = vmatpush1.msra.mxu0 0.0
        %1294 = vmatprep.subr.mxu0 0.0
        %1295 = vmatpush1.msra.mxu0 0.0
        %1296 = vmatprep.subr.mxu0 0.0
        %1297 = vmatpush1.msra.mxu0 0.0
        %1298 = vmatprep.subr.mxu0 0.0
        %1299 = vmatpush1.msra.mxu0 0.0
        %1300 = vmatprep.subr.mxu0 0.0
        %1301 = vmatpush1.msra.mxu0 0.0
        %1302 = vmatprep.subr.mxu0 0.0
        %1303 = vmatpush1.msra.mxu0 0.0
        %1304 = vmatprep.subr.mxu0 0.0
        %1305 = vmatpush1.msra.mxu0 0.0
        %1306 = vmatprep.subr.mxu0 0.0
        %1307 = vmatpush1.msra.mxu0 0.0
        %1308 = vmatprep.subr.mxu0 0.0
        %1309 = vmatpush1.msra.mxu0 0.0
        %1310 = vmatprep.subr.mxu0 0.0
        %1311 = vmatpush1.msra.mxu0 0.0
        %1312 = vmatprep.subr.mxu0 0.0
        %1313 = vmatpush1.msra.mxu0 0.0
        %1314 = vmatprep.subr.mxu0 0.0
        %1315 = vmatpush1.msra.mxu0 0.0
        %1316 = vmatprep.subr.mxu0 0.0
        %1317 = vmatpush1.msra.mxu0 0.0
        %1318 = vmatprep.subr.mxu0 0.0
        %1319 = vmatpush1.msra.mxu0 0.0
        %1320 = vmatprep.mubr.f32.mxu0 0.0
        %1321 = vmatmul.mubr.f32.gmra.mrb[0].mxu0 %v1252
        %v1322 = vpop.f32.mrb[0].mxu0
        %v1323 = vadd.f32 0.0, %v1322
        %v1324 = vpop.f32.mrb[0].mxu0
        %1325 = vdwg.mxu0
        %v1326 = vadd.f32 %v1084, %v1323
        %1327 = vrot.lane.b32.xlu0 %v352, 112
        %v1328 = vpop.permute.xlu0 %1327
        %1329 = vrot.lane.b32.xlu0 %v352, 80
        %v1330 = vpop.permute.xlu0 %1329
        %v1331 = vsel %vm362, %v1328, 0
        %v1333 = vsel %vm362, %v1330, 0
        %1335 = vmatprep.subr.mxu0 0.0
        %1336 = vmatpush1.xpose.msra.mxu0 %v1333
        %1337 = vmatprep.subr.mxu0 0.0
        %1338 = vmatpush1.xpose.msra.mxu0 0.0
        %1339 = vmatprep.subr.mxu0 0.0
        %1340 = vmatpush1.xpose.msra.mxu0 0.0
        %1341 = vmatprep.subr.mxu0 0.0
        %1342 = vmatpush1.xpose.msra.mxu0 0.0
        %1343 = vmatprep.subr.mxu0 0.0
        %1344 = vmatpush1.xpose.msra.mxu0 0.0
        %1345 = vmatprep.subr.mxu0 0.0
        %1346 = vmatpush1.xpose.msra.mxu0 0.0
        %1347 = vmatprep.subr.mxu0 0.0
        %1348 = vmatpush1.xpose.msra.mxu0 0.0
        %1349 = vmatprep.subr.mxu0 0.0
        %1350 = vmatpush1.xpose.msra.mxu0 0.0
        %1351 = vmatprep.subr.mxu0 0.0
        %1352 = vmatpush1.xpose.msra.mxu0 0.0
        %1353 = vmatprep.subr.mxu0 0.0
        %1354 = vmatpush1.xpose.msra.mxu0 0.0
        %1355 = vmatprep.subr.mxu0 0.0
        %1356 = vmatpush1.xpose.msra.mxu0 0.0
        %1357 = vmatprep.subr.mxu0 0.0
        %1358 = vmatpush1.xpose.msra.mxu0 0.0
        %1359 = vmatprep.subr.mxu0 0.0
        %1360 = vmatpush1.xpose.msra.mxu0 0.0
        %1361 = vmatprep.subr.mxu0 0.0
        %1362 = vmatpush1.xpose.msra.mxu0 0.0
        %1363 = vmatprep.subr.mxu0 0.0
        %1364 = vmatpush1.xpose.msra.mxu0 0.0
        %1365 = vmatprep.subr.mxu0 0.0
        %1366 = vmatpush1.xpose.msra.mxu0 0.0
        %1367 = vmatprep.subr.mxu0 0.0
        %1368 = vmatpush1.xpose.msra.mxu0 0.0
        %1369 = vmatprep.subr.mxu0 0.0
        %1370 = vmatpush1.xpose.msra.mxu0 0.0
        %1371 = vmatprep.subr.mxu0 0.0
        %1372 = vmatpush1.xpose.msra.mxu0 0.0
        %1373 = vmatprep.subr.mxu0 0.0
        %1374 = vmatpush1.xpose.msra.mxu0 0.0
        %1375 = vmatprep.subr.mxu0 0.0
        %1376 = vmatpush1.xpose.msra.mxu0 0.0
        %1377 = vmatprep.subr.mxu0 0.0
        %1378 = vmatpush1.xpose.msra.mxu0 0.0
        %1379 = vmatprep.subr.mxu0 0.0
        %1380 = vmatpush1.xpose.msra.mxu0 0.0
        %1381 = vmatprep.subr.mxu0 0.0
        %1382 = vmatpush1.xpose.msra.mxu0 0.0
        %1383 = vmatprep.subr.mxu0 0.0
        %1384 = vmatpush1.xpose.msra.mxu0 0.0
        %1385 = vmatprep.subr.mxu0 0.0
        %1386 = vmatpush1.xpose.msra.mxu0 0.0
        %1387 = vmatprep.subr.mxu0 0.0
        %1388 = vmatpush1.xpose.msra.mxu0 0.0
        %1389 = vmatprep.subr.mxu0 0.0
        %1390 = vmatpush1.xpose.msra.mxu0 0.0
        %1391 = vmatprep.subr.mxu0 0.0
        %1392 = vmatpush1.xpose.msra.mxu0 0.0
        %1393 = vmatprep.subr.mxu0 0.0
        %1394 = vmatpush1.xpose.msra.mxu0 0.0
        %1395 = vmatprep.subr.mxu0 0.0
        %1396 = vmatpush1.xpose.msra.mxu0 0.0
        %1397 = vmatprep.subr.mxu0 0.0
        %1398 = vmatpush1.xpose.msra.mxu0 0.0
        %1399 = vmatprep.mubr.f32.mxu0 0.0
        %1400 = vmatmul.mubr.f32.gmra.mrb[0].mxu0 %v1331
        %v1401 = vpop.f32.mrb[0].mxu0
        %v1402 = vadd.f32 0.0, %v1401
        %v1403 = vpop.f32.mrb[0].mxu0
        %1404 = vdwg.mxu0
        %v1405 = vsel %vm437, %v1402, -inf
        %1406 = vmax.xlane.f32.xlu0 %v1405
        %v1407 = vpop.xlane.xlu0 %1406
        %v1408 = vsub.f32 %v1402, %v1407
        %v1409 = vmul.f32 %v1408, 1.442695
        %v1410 = vpow.pop %v1409
        %v1411 = vsel %vm437, %v1410, 0.0
        %1412 = vadd.xlane.f32.xlu0 %v1411
        %v1413 = vpop.xlane.xlu0 %1412
        %v1414 = vrcp.pop %v1413
        %v1415 = vmul.f32 %v1410, %v1414
        %1416 = vrot.lane.b32.xlu0 %v352, 48
        %v1417 = vpop.permute.xlu0 %1416
        %v1420 = vsel %vm437, %v1415, 0
        %1422 = vmatprep.subr.mxu0 0.0
        %1423 = vmatpush1.msra.mxu0 %v1417
        %1424 = vmatprep.subr.mxu0 0.0
        %1425 = vmatpush1.msra.mxu0 0.0
        %1426 = vmatprep.subr.mxu0 0.0
        %1427 = vmatpush1.msra.mxu0 0.0
        %1428 = vmatprep.subr.mxu0 0.0
        %1429 = vmatpush1.msra.mxu0 0.0
        %1430 = vmatprep.subr.mxu0 0.0
        %1431 = vmatpush1.msra.mxu0 0.0
        %1432 = vmatprep.subr.mxu0 0.0
        %1433 = vmatpush1.msra.mxu0 0.0
        %1434 = vmatprep.subr.mxu0 0.0
        %1435 = vmatpush1.msra.mxu0 0.0
        %1436 = vmatprep.subr.mxu0 0.0
        %1437 = vmatpush1.msra.mxu0 0.0
        %1438 = vmatprep.subr.mxu0 0.0
        %1439 = vmatpush1.msra.mxu0 0.0
        %1440 = vmatprep.subr.mxu0 0.0
        %1441 = vmatpush1.msra.mxu0 0.0
        %1442 = vmatprep.subr.mxu0 0.0
        %1443 = vmatpush1.msra.mxu0 0.0
        %1444 = vmatprep.subr.mxu0 0.0
        %1445 = vmatpush1.msra.mxu0 0.0
        %1446 = vmatprep.subr.mxu0 0.0
        %1447 = vmatpush1.msra.mxu0 0.0
        %1448 = vmatprep.subr.mxu0 0.0
        %1449 = vmatpush1.msra.mxu0 0.0
        %1450 = vmatprep.subr.mxu0 0.0
        %1451 = vmatpush1.msra.mxu0 0.0
        %1452 = vmatprep.subr.mxu0 0.0
        %1453 = vmatpush1.msra.mxu0 0.0
        %1454 = vmatprep.subr.mxu0 0.0
        %1455 = vmatpush1.msra.mxu0 0.0
        %1456 = vmatprep.subr.mxu0 0.0
        %1457 = vmatpush1.msra.mxu0 0.0
        %1458 = vmatprep.subr.mxu0 0.0
        %1459 = vmatpush1.msra.mxu0 0.0
        %1460 = vmatprep.subr.mxu0 0.0
        %1461 = vmatpush1.msra.mxu0 0.0
        %1462 = vmatprep.subr.mxu0 0.0
        %1463 = vmatpush1.msra.mxu0 0.0
        %1464 = vmatprep.subr.mxu0 0.0
        %1465 = vmatpush1.msra.mxu0 0.0
        %1466 = vmatprep.subr.mxu0 0.0
        %1467 = vmatpush1.msra.mxu0 0.0
        %1468 = vmatprep.subr.mxu0 0.0
        %1469 = vmatpush1.msra.mxu0 0.0
        %1470 = vmatprep.subr.mxu0 0.0
        %1471 = vmatpush1.msra.mxu0 0.0
        %1472 = vmatprep.subr.mxu0 0.0
        %1473 = vmatpush1.msra.mxu0 0.0
        %1474 = vmatprep.subr.mxu0 0.0
        %1475 = vmatpush1.msra.mxu0 0.0
        %1476 = vmatprep.subr.mxu0 0.0
        %1477 = vmatpush1.msra.mxu0 0.0
        %1478 = vmatprep.subr.mxu0 0.0
        %1479 = vmatpush1.msra.mxu0 0.0
        %1480 = vmatprep.subr.mxu0 0.0
        %1481 = vmatpush1.msra.mxu0 0.0
        %1482 = vmatprep.subr.mxu0 0.0
        %1483 = vmatpush1.msra.mxu0 0.0
        %1484 = vmatprep.subr.mxu0 0.0
        %1485 = vmatpush1.msra.mxu0 0.0
        %1486 = vmatprep.mubr.f32.mxu0 0.0
        %1487 = vmatmul.mubr.f32.gmra.mrb[0].mxu0 %v1420
        %v1488 = vpop.f32.mrb[0].mxu0
        %v1489 = vadd.f32 0.0, %v1488
        %v1490 = vpop.f32.mrb[0].mxu0
        %1491 = vdwg.mxu0
        %v1493 = vsel %vm362, %v1489, 0
        %v1496 = vsel %vm695, %v357, 0
        %1498 = vmatprep.subr.mxu0 0.0
        %1499 = vmatpush1.msra.mxu0 %v1496
        %1500 = vmatprep.subr.mxu0 0.0
        %1501 = vmatpush1.msra.mxu0 0.0
        %1502 = vmatprep.subr.mxu0 0.0
        %1503 = vmatpush1.msra.mxu0 0.0
        %1504 = vmatprep.subr.mxu0 0.0
        %1505 = vmatpush1.msra.mxu0 0.0
        %1506 = vmatprep.subr.mxu0 0.0
        %1507 = vmatpush1.msra.mxu0 0.0
        %1508 = vmatprep.subr.mxu0 0.0
        %1509 = vmatpush1.msra.mxu0 0.0
        %1510 = vmatprep.subr.mxu0 0.0
        %1511 = vmatpush1.msra.mxu0 0.0
        %1512 = vmatprep.subr.mxu0 0.0
        %1513 = vmatpush1.msra.mxu0 0.0
        %1514 = vmatprep.subr.mxu0 0.0
        %1515 = vmatpush1.msra.mxu0 0.0
        %1516 = vmatprep.subr.mxu0 0.0
        %1517 = vmatpush1.msra.mxu0 0.0
        %1518 = vmatprep.subr.mxu0 0.0
        %1519 = vmatpush1.msra.mxu0 0.0
        %1520 = vmatprep.subr.mxu0 0.0
        %1521 = vmatpush1.msra.mxu0 0.0
        %1522 = vmatprep.subr.mxu0 0.0
        %1523 = vmatpush1.msra.mxu0 0.0
        %1524 = vmatprep.subr.mxu0 0.0
        %1525 = vmatpush1.msra.mxu0 0.0
        %1526 = vmatprep.subr.mxu0 0.0
        %1527 = vmatpush1.msra.mxu0 0.0
        %1528 = vmatprep.subr.mxu0 0.0
        %1529 = vmatpush1.msra.mxu0 0.0
        %1530 = vmatprep.subr.mxu0 0.0
        %1531 = vmatpush1.msra.mxu0 0.0
        %1532 = vmatprep.subr.mxu0 0.0
        %1533 = vmatpush1.msra.mxu0 0.0
        %1534 = vmatprep.subr.mxu0 0.0
        %1535 = vmatpush1.msra.mxu0 0.0
        %1536 = vmatprep.subr.mxu0 0.0
        %1537 = vmatpush1.msra.mxu0 0.0
        %1538 = vmatprep.subr.mxu0 0.0
        %1539 = vmatpush1.msra.mxu0 0.0
        %1540 = vmatprep.subr.mxu0 0.0
        %1541 = vmatpush1.msra.mxu0 0.0
        %1542 = vmatprep.subr.mxu0 0.0
        %1543 = vmatpush1.msra.mxu0 0.0
        %1544 = vmatprep.subr.mxu0 0.0
        %1545 = vmatpush1.msra.mxu0 0.0
        %1546 = vmatprep.subr.mxu0 0.0
        %1547 = vmatpush1.msra.mxu0 0.0
        %1548 = vmatprep.subr.mxu0 0.0
        %1549 = vmatpush1.msra.mxu0 0.0
        %1550 = vmatprep.subr.mxu0 0.0
        %1551 = vmatpush1.msra.mxu0 0.0
        %1552 = vmatprep.subr.mxu0 0.0
        %1553 = vmatpush1.msra.mxu0 0.0
        %1554 = vmatprep.subr.mxu0 0.0
        %1555 = vmatpush1.msra.mxu0 0.0
        %1556 = vmatprep.subr.mxu0 0.0
        %1557 = vmatpush1.msra.mxu0 0.0
        %1558 = vmatprep.subr.mxu0 0.0
        %1559 = vmatpush1.msra.mxu0 0.0
        %1560 = vmatprep.subr.mxu0 0.0
        %1561 = vmatpush1.msra.mxu0 0.0
        %1562 = vmatprep.mubr.f32.mxu0 0.0
        %1563 = vmatmul.mubr.f32.gmra.mrb[0].mxu0 %v1493
        %v1564 = vpop.f32.mrb[0].mxu0
        %v1565 = vadd.f32 0.0, %v1564
        %v1566 = vpop.f32.mrb[0].mxu0
        %1567 = vdwg.mxu0
        %v1568 = vadd.f32 %v1326, %v1565
        %1569 = vrot.lane.b32.xlu0 %v352, 108
        %v1570 = vpop.permute.xlu0 %1569
        %1571 = vrot.lane.b32.xlu0 %v352, 76
        %v1572 = vpop.permute.xlu0 %1571
        %v1573 = vsel %vm362, %v1570, 0
        %v1575 = vsel %vm362, %v1572, 0
        %1577 = vmatprep.subr.mxu0 0.0
        %1578 = vmatpush1.xpose.msra.mxu0 %v1575
        %1579 = vmatprep.subr.mxu0 0.0
        %1580 = vmatpush1.xpose.msra.mxu0 0.0
        %1581 = vmatprep.subr.mxu0 0.0
        %1582 = vmatpush1.xpose.msra.mxu0 0.0
        %1583 = vmatprep.subr.mxu0 0.0
        %1584 = vmatpush1.xpose.msra.mxu0 0.0
        %1585 = vmatprep.subr.mxu0 0.0
        %1586 = vmatpush1.xpose.msra.mxu0 0.0
        %1587 = vmatprep.subr.mxu0 0.0
        %1588 = vmatpush1.xpose.msra.mxu0 0.0
        %1589 = vmatprep.subr.mxu0 0.0
        %1590 = vmatpush1.xpose.msra.mxu0 0.0
        %1591 = vmatprep.subr.mxu0 0.0
        %1592 = vmatpush1.xpose.msra.mxu0 0.0
        %1593 = vmatprep.subr.mxu0 0.0
        %1594 = vmatpush1.xpose.msra.mxu0 0.0
        %1595 = vmatprep.subr.mxu0 0.0
        %1596 = vmatpush1.xpose.msra.mxu0 0.0
        %1597 = vmatprep.subr.mxu0 0.0
        %1598 = vmatpush1.xpose.msra.mxu0 0.0
        %1599 = vmatprep.subr.mxu0 0.0
        %1600 = vmatpush1.xpose.msra.mxu0 0.0
        %1601 = vmatprep.subr.mxu0 0.0
        %1602 = vmatpush1.xpose.msra.mxu0 0.0
        %1603 = vmatprep.subr.mxu0 0.0
        %1604 = vmatpush1.xpose.msra.mxu0 0.0
        %1605 = vmatprep.subr.mxu0 0.0
        %1606 = vmatpush1.xpose.msra.mxu0 0.0
        %1607 = vmatprep.subr.mxu0 0.0
        %1608 = vmatpush1.xpose.msra.mxu0 0.0
        %1609 = vmatprep.subr.mxu0 0.0
        %1610 = vmatpush1.xpose.msra.mxu0 0.0
        %1611 = vmatprep.subr.mxu0 0.0
        %1612 = vmatpush1.xpose.msra.mxu0 0.0
        %1613 = vmatprep.subr.mxu0 0.0
        %1614 = vmatpush1.xpose.msra.mxu0 0.0
        %1615 = vmatprep.subr.mxu0 0.0
        %1616 = vmatpush1.xpose.msra.mxu0 0.0
        %1617 = vmatprep.subr.mxu0 0.0
        %1618 = vmatpush1.xpose.msra.mxu0 0.0
        %1619 = vmatprep.subr.mxu0 0.0
        %1620 = vmatpush1.xpose.msra.mxu0 0.0
        %1621 = vmatprep.subr.mxu0 0.0
        %1622 = vmatpush1.xpose.msra.mxu0 0.0
        %1623 = vmatprep.subr.mxu0 0.0
        %1624 = vmatpush1.xpose.msra.mxu0 0.0
        %1625 = vmatprep.subr.mxu0 0.0
        %1626 = vmatpush1.xpose.msra.mxu0 0.0
        %1627 = vmatprep.subr.mxu0 0.0
        %1628 = vmatpush1.xpose.msra.mxu0 0.0
        %1629 = vmatprep.subr.mxu0 0.0
        %1630 = vmatpush1.xpose.msra.mxu0 0.0
        %1631 = vmatprep.subr.mxu0 0.0
        %1632 = vmatpush1.xpose.msra.mxu0 0.0
        %1633 = vmatprep.subr.mxu0 0.0
        %1634 = vmatpush1.xpose.msra.mxu0 0.0
        %1635 = vmatprep.subr.mxu0 0.0
        %1636 = vmatpush1.xpose.msra.mxu0 0.0
        %1637 = vmatprep.subr.mxu0 0.0
        %1638 = vmatpush1.xpose.msra.mxu0 0.0
        %1639 = vmatprep.subr.mxu0 0.0
        %1640 = vmatpush1.xpose.msra.mxu0 0.0
        %1641 = vmatprep.mubr.f32.mxu0 0.0
        %1642 = vmatmul.mubr.f32.gmra.mrb[0].mxu0 %v1573
        %v1643 = vpop.f32.mrb[0].mxu0
        %v1644 = vadd.f32 0.0, %v1643
        %v1645 = vpop.f32.mrb[0].mxu0
        %1646 = vdwg.mxu0
        %v1647 = vsel %vm437, %v1644, -inf
        %1648 = vmax.xlane.f32.xlu0 %v1647
        %v1649 = vpop.xlane.xlu0 %1648
        %v1650 = vsub.f32 %v1644, %v1649
        %v1651 = vmul.f32 %v1650, 1.442695
        %v1652 = vpow.pop %v1651
        %v1653 = vsel %vm437, %v1652, 0.0
        %1654 = vadd.xlane.f32.xlu0 %v1653
        %v1655 = vpop.xlane.xlu0 %1654
        %v1656 = vrcp.pop %v1655
        %v1657 = vmul.f32 %v1652, %v1656
        %1658 = vrot.lane.b32.xlu0 %v352, 44
        %v1659 = vpop.permute.xlu0 %1658
        %v1662 = vsel %vm437, %v1657, 0
        %1664 = vmatprep.subr.mxu0 0.0
        %1665 = vmatpush1.msra.mxu0 %v1659
        %1666 = vmatprep.subr.mxu0 0.0
        %1667 = vmatpush1.msra.mxu0 0.0
        %1668 = vmatprep.subr.mxu0 0.0
        %1669 = vmatpush1.msra.mxu0 0.0
        %1670 = vmatprep.subr.mxu0 0.0
        %1671 = vmatpush1.msra.mxu0 0.0
        %1672 = vmatprep.subr.mxu0 0.0
        %1673 = vmatpush1.msra.mxu0 0.0
        %1674 = vmatprep.subr.mxu0 0.0
        %1675 = vmatpush1.msra.mxu0 0.0
        %1676 = vmatprep.subr.mxu0 0.0
        %1677 = vmatpush1.msra.mxu0 0.0
        %1678 = vmatprep.subr.mxu0 0.0
        %1679 = vmatpush1.msra.mxu0 0.0
        %1680 = vmatprep.subr.mxu0 0.0
        %1681 = vmatpush1.msra.mxu0 0.0
        %1682 = vmatprep.subr.mxu0 0.0
        %1683 = vmatpush1.msra.mxu0 0.0
        %1684 = vmatprep.subr.mxu0 0.0
        %1685 = vmatpush1.msra.mxu0 0.0
        %1686 = vmatprep.subr.mxu0 0.0
        %1687 = vmatpush1.msra.mxu0 0.0
        %1688 = vmatprep.subr.mxu0 0.0
        %1689 = vmatpush1.msra.mxu0 0.0
        %1690 = vmatprep.subr.mxu0 0.0
        %1691 = vmatpush1.msra.mxu0 0.0
        %1692 = vmatprep.subr.mxu0 0.0
        %1693 = vmatpush1.msra.mxu0 0.0
        %1694 = vmatprep.subr.mxu0 0.0
        %1695 = vmatpush1.msra.mxu0 0.0
        %1696 = vmatprep.subr.mxu0 0.0
        %1697 = vmatpush1.msra.mxu0 0.0
        %1698 = vmatprep.subr.mxu0 0.0
        %1699 = vmatpush1.msra.mxu0 0.0
        %1700 = vmatprep.subr.mxu0 0.0
        %1701 = vmatpush1.msra.mxu0 0.0
        %1702 = vmatprep.subr.mxu0 0.0
        %1703 = vmatpush1.msra.mxu0 0.0
        %1704 = vmatprep.subr.mxu0 0.0
        %1705 = vmatpush1.msra.mxu0 0.0
        %1706 = vmatprep.subr.mxu0 0.0
        %1707 = vmatpush1.msra.mxu0 0.0
        %1708 = vmatprep.subr.mxu0 0.0
        %1709 = vmatpush1.msra.mxu0 0.0
        %1710 = vmatprep.subr.mxu0 0.0
        %1711 = vmatpush1.msra.mxu0 0.0
        %1712 = vmatprep.subr.mxu0 0.0
        %1713 = vmatpush1.msra.mxu0 0.0
        %1714 = vmatprep.subr.mxu0 0.0
        %1715 = vmatpush1.msra.mxu0 0.0
        %1716 = vmatprep.subr.mxu0 0.0
        %1717 = vmatpush1.msra.mxu0 0.0
        %1718 = vmatprep.subr.mxu0 0.0
        %1719 = vmatpush1.msra.mxu0 0.0
        %1720 = vmatprep.subr.mxu0 0.0
        %1721 = vmatpush1.msra.mxu0 0.0
        %1722 = vmatprep.subr.mxu0 0.0
        %1723 = vmatpush1.msra.mxu0 0.0
        %1724 = vmatprep.subr.mxu0 0.0
        %1725 = vmatpush1.msra.mxu0 0.0
        %1726 = vmatprep.subr.mxu0 0.0
        %1727 = vmatpush1.msra.mxu0 0.0
        %1728 = vmatprep.mubr.f32.mxu0 0.0
        %1729 = vmatmul.mubr.f32.gmra.mrb[0].mxu0 %v1662
        %v1730 = vpop.f32.mrb[0].mxu0
        %v1731 = vadd.f32 0.0, %v1730
        %v1732 = vpop.f32.mrb[0].mxu0
        %1733 = vdwg.mxu0
        %v1734 = vrot.slane %v357, 4
        %v1736 = vsel %vm362, %v1731, 0
        %v1738 = vsel %vm695, %v1734, 0
        %1740 = vmatprep.subr.mxu0 0.0
        %1741 = vmatpush1.msra.mxu0 %v1738
        %1742 = vmatprep.subr.mxu0 0.0
        %1743 = vmatpush1.msra.mxu0 0.0
        %1744 = vmatprep.subr.mxu0 0.0
        %1745 = vmatpush1.msra.mxu0 0.0
        %1746 = vmatprep.subr.mxu0 0.0
        %1747 = vmatpush1.msra.mxu0 0.0
        %1748 = vmatprep.subr.mxu0 0.0
        %1749 = vmatpush1.msra.mxu0 0.0
        %1750 = vmatprep.subr.mxu0 0.0
        %1751 = vmatpush1.msra.mxu0 0.0
        %1752 = vmatprep.subr.mxu0 0.0
        %1753 = vmatpush1.msra.mxu0 0.0
        %1754 = vmatprep.subr.mxu0 0.0
        %1755 = vmatpush1.msra.mxu0 0.0
        %1756 = vmatprep.subr.mxu0 0.0
        %1757 = vmatpush1.msra.mxu0 0.0
        %1758 = vmatprep.subr.mxu0 0.0
        %1759 = vmatpush1.msra.mxu0 0.0
        %1760 = vmatprep.subr.mxu0 0.0
        %1761 = vmatpush1.msra.mxu0 0.0
        %1762 = vmatprep.subr.mxu0 0.0
        %1763 = vmatpush1.msra.mxu0 0.0
        %1764 = vmatprep.subr.mxu0 0.0
        %1765 = vmatpush1.msra.mxu0 0.0
        %1766 = vmatprep.subr.mxu0 0.0
        %1767 = vmatpush1.msra.mxu0 0.0
        %1768 = vmatprep.subr.mxu0 0.0
        %1769 = vmatpush1.msra.mxu0 0.0
        %1770 = vmatprep.subr.mxu0 0.0
        %1771 = vmatpush1.msra.mxu0 0.0
        %1772 = vmatprep.subr.mxu0 0.0
        %1773 = vmatpush1.msra.mxu0 0.0
        %1774 = vmatprep.subr.mxu0 0.0
        %1775 = vmatpush1.msra.mxu0 0.0
        %1776 = vmatprep.subr.mxu0 0.0
        %1777 = vmatpush1.msra.mxu0 0.0
        %1778 = vmatprep.subr.mxu0 0.0
        %1779 = vmatpush1.msra.mxu0 0.0
        %1780 = vmatprep.subr.mxu0 0.0
        %1781 = vmatpush1.msra.mxu0 0.0
        %1782 = vmatprep.subr.mxu0 0.0
        %1783 = vmatpush1.msra.mxu0 0.0
        %1784 = vmatprep.subr.mxu0 0.0
        %1785 = vmatpush1.msra.mxu0 0.0
        %1786 = vmatprep.subr.mxu0 0.0
        %1787 = vmatpush1.msra.mxu0 0.0
        %1788 = vmatprep.subr.mxu0 0.0
        %1789 = vmatpush1.msra.mxu0 0.0
        %1790 = vmatprep.subr.mxu0 0.0
        %1791 = vmatpush1.msra.mxu0 0.0
        %1792 = vmatprep.subr.mxu0 0.0
        %1793 = vmatpush1.msra.mxu0 0.0
        %1794 = vmatprep.subr.mxu0 0.0
        %1795 = vmatpush1.msra.mxu0 0.0
        %1796 = vmatprep.subr.mxu0 0.0
        %1797 = vmatpush1.msra.mxu0 0.0
        %1798 = vmatprep.subr.mxu0 0.0
        %1799 = vmatpush1.msra.mxu0 0.0
        %1800 = vmatprep.subr.mxu0 0.0
        %1801 = vmatpush1.msra.mxu0 0.0
        %1802 = vmatprep.subr.mxu0 0.0
        %1803 = vmatpush1.msra.mxu0 0.0
        %1804 = vmatprep.mubr.f32.mxu0 0.0
        %1805 = vmatmul.mubr.f32.gmra.mrb[0].mxu0 %v1736
        %v1806 = vpop.f32.mrb[0].mxu0
        %v1807 = vadd.f32 0.0, %v1806
        %v1808 = vpop.f32.mrb[0].mxu0
        %1809 = vdwg.mxu0
        %v1810 = vadd.f32 %v1568, %v1807
        %1811 = vrot.lane.b32.xlu0 %v352, 104
        %v1812 = vpop.permute.xlu0 %1811
        %1813 = vrot.lane.b32.xlu0 %v352, 72
        %v1814 = vpop.permute.xlu0 %1813
        %v1815 = vsel %vm362, %v1812, 0
        %v1817 = vsel %vm362, %v1814, 0
        %1819 = vmatprep.subr.mxu0 0.0
        %1820 = vmatpush1.xpose.msra.mxu0 %v1817
        %1821 = vmatprep.subr.mxu0 0.0
        %1822 = vmatpush1.xpose.msra.mxu0 0.0
        %1823 = vmatprep.subr.mxu0 0.0
        %1824 = vmatpush1.xpose.msra.mxu0 0.0
        %1825 = vmatprep.subr.mxu0 0.0
        %1826 = vmatpush1.xpose.msra.mxu0 0.0
        %1827 = vmatprep.subr.mxu0 0.0
        %1828 = vmatpush1.xpose.msra.mxu0 0.0
        %1829 = vmatprep.subr.mxu0 0.0
        %1830 = vmatpush1.xpose.msra.mxu0 0.0
        %1831 = vmatprep.subr.mxu0 0.0
        %1832 = vmatpush1.xpose.msra.mxu0 0.0
        %1833 = vmatprep.subr.mxu0 0.0
        %1834 = vmatpush1.xpose.msra.mxu0 0.0
        %1835 = vmatprep.subr.mxu0 0.0
        %1836 = vmatpush1.xpose.msra.mxu0 0.0
        %1837 = vmatprep.subr.mxu0 0.0
        %1838 = vmatpush1.xpose.msra.mxu0 0.0
        %1839 = vmatprep.subr.mxu0 0.0
        %1840 = vmatpush1.xpose.msra.mxu0 0.0
        %1841 = vmatprep.subr.mxu0 0.0
        %1842 = vmatpush1.xpose.msra.mxu0 0.0
        %1843 = vmatprep.subr.mxu0 0.0
        %1844 = vmatpush1.xpose.msra.mxu0 0.0
        %1845 = vmatprep.subr.mxu0 0.0
        %1846 = vmatpush1.xpose.msra.mxu0 0.0
        %1847 = vmatprep.subr.mxu0 0.0
        %1848 = vmatpush1.xpose.msra.mxu0 0.0
        %1849 = vmatprep.subr.mxu0 0.0
        %1850 = vmatpush1.xpose.msra.mxu0 0.0
        %1851 = vmatprep.subr.mxu0 0.0
        %1852 = vmatpush1.xpose.msra.mxu0 0.0
        %1853 = vmatprep.subr.mxu0 0.0
        %1854 = vmatpush1.xpose.msra.mxu0 0.0
        %1855 = vmatprep.subr.mxu0 0.0
        %1856 = vmatpush1.xpose.msra.mxu0 0.0
        %1857 = vmatprep.subr.mxu0 0.0
        %1858 = vmatpush1.xpose.msra.mxu0 0.0
        %1859 = vmatprep.subr.mxu0 0.0
        %1860 = vmatpush1.xpose.msra.mxu0 0.0
        %1861 = vmatprep.subr.mxu0 0.0
        %1862 = vmatpush1.xpose.msra.mxu0 0.0
        %1863 = vmatprep.subr.mxu0 0.0
        %1864 = vmatpush1.xpose.msra.mxu0 0.0
        %1865 = vmatprep.subr.mxu0 0.0
        %1866 = vmatpush1.xpose.msra.mxu0 0.0
        %1867 = vmatprep.subr.mxu0 0.0
        %1868 = vmatpush1.xpose.msra.mxu0 0.0
        %1869 = vmatprep.subr.mxu0 0.0
        %1870 = vmatpush1.xpose.msra.mxu0 0.0
        %1871 = vmatprep.subr.mxu0 0.0
        %1872 = vmatpush1.xpose.msra.mxu0 0.0
        %1873 = vmatprep.subr.mxu0 0.0
        %1874 = vmatpush1.xpose.msra.mxu0 0.0
        %1875 = vmatprep.subr.mxu0 0.0
        %1876 = vmatpush1.xpose.msra.mxu0 0.0
        %1877 = vmatprep.subr.mxu0 0.0
        %1878 = vmatpush1.xpose.msra.mxu0 0.0
        %1879 = vmatprep.subr.mxu0 0.0
        %1880 = vmatpush1.xpose.msra.mxu0 0.0
        %1881 = vmatprep.subr.mxu0 0.0
        %1882 = vmatpush1.xpose.msra.mxu0 0.0
        %1883 = vmatprep.mubr.f32.mxu0 0.0
        %1884 = vmatmul.mubr.f32.gmra.mrb[0].mxu0 %v1815
        %v1885 = vpop.f32.mrb[0].mxu0
        %v1886 = vadd.f32 0.0, %v1885
        %v1887 = vpop.f32.mrb[0].mxu0
        %1888 = vdwg.mxu0
        %v1889 = vsel %vm437, %v1886, -inf
        %1890 = vmax.xlane.f32.xlu0 %v1889
        %v1891 = vpop.xlane.xlu0 %1890
        %v1892 = vsub.f32 %v1886, %v1891
        %v1893 = vmul.f32 %v1892, 1.442695
        %v1894 = vpow.pop %v1893
        %v1895 = vsel %vm437, %v1894, 0.0
        %1896 = vadd.xlane.f32.xlu0 %v1895
        %v1897 = vpop.xlane.xlu0 %1896
        %v1898 = vrcp.pop %v1897
        %v1899 = vmul.f32 %v1894, %v1898
        %1900 = vrot.lane.b32.xlu0 %v352, 40
        %v1901 = vpop.permute.xlu0 %1900
        %v1904 = vsel %vm437, %v1899, 0
        %1906 = vmatprep.subr.mxu0 0.0
        %1907 = vmatpush1.msra.mxu0 %v1901
        %1908 = vmatprep.subr.mxu0 0.0
        %1909 = vmatpush1.msra.mxu0 0.0
        %1910 = vmatprep.subr.mxu0 0.0
        %1911 = vmatpush1.msra.mxu0 0.0
        %1912 = vmatprep.subr.mxu0 0.0
        %1913 = vmatpush1.msra.mxu0 0.0
        %1914 = vmatprep.subr.mxu0 0.0
        %1915 = vmatpush1.msra.mxu0 0.0
        %1916 = vmatprep.subr.mxu0 0.0
        %1917 = vmatpush1.msra.mxu0 0.0
        %1918 = vmatprep.subr.mxu0 0.0
        %1919 = vmatpush1.msra.mxu0 0.0
        %1920 = vmatprep.subr.mxu0 0.0
        %1921 = vmatpush1.msra.mxu0 0.0
        %1922 = vmatprep.subr.mxu0 0.0
        %1923 = vmatpush1.msra.mxu0 0.0
        %1924 = vmatprep.subr.mxu0 0.0
        %1925 = vmatpush1.msra.mxu0 0.0
        %1926 = vmatprep.subr.mxu0 0.0
        %1927 = vmatpush1.msra.mxu0 0.0
        %1928 = vmatprep.subr.mxu0 0.0
        %1929 = vmatpush1.msra.mxu0 0.0
        %1930 = vmatprep.subr.mxu0 0.0
        %1931 = vmatpush1.msra.mxu0 0.0
        %1932 = vmatprep.subr.mxu0 0.0
        %1933 = vmatpush1.msra.mxu0 0.0
        %1934 = vmatprep.subr.mxu0 0.0
        %1935 = vmatpush1.msra.mxu0 0.0
        %1936 = vmatprep.subr.mxu0 0.0
        %1937 = vmatpush1.msra.mxu0 0.0
        %1938 = vmatprep.subr.mxu0 0.0
        %1939 = vmatpush1.msra.mxu0 0.0
        %1940 = vmatprep.subr.mxu0 0.0
        %1941 = vmatpush1.msra.mxu0 0.0
        %1942 = vmatprep.subr.mxu0 0.0
        %1943 = vmatpush1.msra.mxu0 0.0
        %1944 = vmatprep.subr.mxu0 0.0
        %1945 = vmatpush1.msra.mxu0 0.0
        %1946 = vmatprep.subr.mxu0 0.0
        %1947 = vmatpush1.msra.mxu0 0.0
        %1948 = vmatprep.subr.mxu0 0.0
        %1949 = vmatpush1.msra.mxu0 0.0
        %1950 = vmatprep.subr.mxu0 0.0
        %1951 = vmatpush1.msra.mxu0 0.0
        %1952 = vmatprep.subr.mxu0 0.0
        %1953 = vmatpush1.msra.mxu0 0.0
        %1954 = vmatprep.subr.mxu0 0.0
        %1955 = vmatpush1.msra.mxu0 0.0
        %1956 = vmatprep.subr.mxu0 0.0
        %1957 = vmatpush1.msra.mxu0 0.0
        %1958 = vmatprep.subr.mxu0 0.0
        %1959 = vmatpush1.msra.mxu0 0.0
        %1960 = vmatprep.subr.mxu0 0.0
        %1961 = vmatpush1.msra.mxu0 0.0
        %1962 = vmatprep.subr.mxu0 0.0
        %1963 = vmatpush1.msra.mxu0 0.0
        %1964 = vmatprep.subr.mxu0 0.0
        %1965 = vmatpush1.msra.mxu0 0.0
        %1966 = vmatprep.subr.mxu0 0.0
        %1967 = vmatpush1.msra.mxu0 0.0
        %1968 = vmatprep.subr.mxu0 0.0
        %1969 = vmatpush1.msra.mxu0 0.0
        %1970 = vmatprep.mubr.f32.mxu0 0.0
        %1971 = vmatmul.mubr.f32.gmra.mrb[0].mxu0 %v1904
        %v1972 = vpop.f32.mrb[0].mxu0
        %v1973 = vadd.f32 0.0, %v1972
        %v1974 = vpop.f32.mrb[0].mxu0
        %1975 = vdwg.mxu0
        %v1977 = vsel %vm362, %v1973, 0
        %v1980 = vsel %vm695, %v358, 0
        %1982 = vmatprep.subr.mxu0 0.0
        %1983 = vmatpush1.msra.mxu0 %v1980
        %1984 = vmatprep.subr.mxu0 0.0
        %1985 = vmatpush1.msra.mxu0 0.0
        %1986 = vmatprep.subr.mxu0 0.0
        %1987 = vmatpush1.msra.mxu0 0.0
        %1988 = vmatprep.subr.mxu0 0.0
        %1989 = vmatpush1.msra.mxu0 0.0
        %1990 = vmatprep.subr.mxu0 0.0
        %1991 = vmatpush1.msra.mxu0 0.0
        %1992 = vmatprep.subr.mxu0 0.0
        %1993 = vmatpush1.msra.mxu0 0.0
        %1994 = vmatprep.subr.mxu0 0.0
        %1995 = vmatpush1.msra.mxu0 0.0
        %1996 = vmatprep.subr.mxu0 0.0
        %1997 = vmatpush1.msra.mxu0 0.0
        %1998 = vmatprep.subr.mxu0 0.0
        %1999 = vmatpush1.msra.mxu0 0.0
        %2000 = vmatprep.subr.mxu0 0.0
        %2001 = vmatpush1.msra.mxu0 0.0
        %2002 = vmatprep.subr.mxu0 0.0
        %2003 = vmatpush1.msra.mxu0 0.0
        %2004 = vmatprep.subr.mxu0 0.0
        %2005 = vmatpush1.msra.mxu0 0.0
        %2006 = vmatprep.subr.mxu0 0.0
        %2007 = vmatpush1.msra.mxu0 0.0
        %2008 = vmatprep.subr.mxu0 0.0
        %2009 = vmatpush1.msra.mxu0 0.0
        %2010 = vmatprep.subr.mxu0 0.0
        %2011 = vmatpush1.msra.mxu0 0.0
        %2012 = vmatprep.subr.mxu0 0.0
        %2013 = vmatpush1.msra.mxu0 0.0
        %2014 = vmatprep.subr.mxu0 0.0
        %2015 = vmatpush1.msra.mxu0 0.0
        %2016 = vmatprep.subr.mxu0 0.0
        %2017 = vmatpush1.msra.mxu0 0.0
        %2018 = vmatprep.subr.mxu0 0.0
        %2019 = vmatpush1.msra.mxu0 0.0
        %2020 = vmatprep.subr.mxu0 0.0
        %2021 = vmatpush1.msra.mxu0 0.0
        %2022 = vmatprep.subr.mxu0 0.0
        %2023 = vmatpush1.msra.mxu0 0.0
        %2024 = vmatprep.subr.mxu0 0.0
        %2025 = vmatpush1.msra.mxu0 0.0
        %2026 = vmatprep.subr.mxu0 0.0
        %2027 = vmatpush1.msra.mxu0 0.0
        %2028 = vmatprep.subr.mxu0 0.0
        %2029 = vmatpush1.msra.mxu0 0.0
        %2030 = vmatprep.subr.mxu0 0.0
        %2031 = vmatpush1.msra.mxu0 0.0
        %2032 = vmatprep.subr.mxu0 0.0
        %2033 = vmatpush1.msra.mxu0 0.0
        %2034 = vmatprep.subr.mxu0 0.0
        %2035 = vmatpush1.msra.mxu0 0.0
        %2036 = vmatprep.subr.mxu0 0.0
        %2037 = vmatpush1.msra.mxu0 0.0
        %2038 = vmatprep.subr.mxu0 0.0
        %2039 = vmatpush1.msra.mxu0 0.0
        %2040 = vmatprep.subr.mxu0 0.0
        %2041 = vmatpush1.msra.mxu0 0.0
        %2042 = vmatprep.subr.mxu0 0.0
        %2043 = vmatpush1.msra.mxu0 0.0
        %2044 = vmatprep.subr.mxu0 0.0
        %2045 = vmatpush1.msra.mxu0 0.0
        %2046 = vmatprep.mubr.f32.mxu0 0.0
        %2047 = vmatmul.mubr.f32.gmra.mrb[0].mxu0 %v1977
        %v2048 = vpop.f32.mrb[0].mxu0
        %v2049 = vadd.f32 0.0, %v2048
        %v2050 = vpop.f32.mrb[0].mxu0
        %2051 = vdwg.mxu0
        %v2052 = vadd.f32 %v1810, %v2049
        %2053 = vrot.lane.b32.xlu0 %v352, 100
        %v2054 = vpop.permute.xlu0 %2053
        %2055 = vrot.lane.b32.xlu0 %v352, 68
        %v2056 = vpop.permute.xlu0 %2055
        %v2057 = vsel %vm362, %v2054, 0
        %v2059 = vsel %vm362, %v2056, 0
        %2061 = vmatprep.subr.mxu0 0.0
        %2062 = vmatpush1.xpose.msra.mxu0 %v2059
        %2063 = vmatprep.subr.mxu0 0.0
        %2064 = vmatpush1.xpose.msra.mxu0 0.0
        %2065 = vmatprep.subr.mxu0 0.0
        %2066 = vmatpush1.xpose.msra.mxu0 0.0
        %2067 = vmatprep.subr.mxu0 0.0
        %2068 = vmatpush1.xpose.msra.mxu0 0.0
        %2069 = vmatprep.subr.mxu0 0.0
        %2070 = vmatpush1.xpose.msra.mxu0 0.0
        %2071 = vmatprep.subr.mxu0 0.0
        %2072 = vmatpush1.xpose.msra.mxu0 0.0
        %2073 = vmatprep.subr.mxu0 0.0
        %2074 = vmatpush1.xpose.msra.mxu0 0.0
        %2075 = vmatprep.subr.mxu0 0.0
        %2076 = vmatpush1.xpose.msra.mxu0 0.0
        %2077 = vmatprep.subr.mxu0 0.0
        %2078 = vmatpush1.xpose.msra.mxu0 0.0
        %2079 = vmatprep.subr.mxu0 0.0
        %2080 = vmatpush1.xpose.msra.mxu0 0.0
        %2081 = vmatprep.subr.mxu0 0.0
        %2082 = vmatpush1.xpose.msra.mxu0 0.0
        %2083 = vmatprep.subr.mxu0 0.0
        %2084 = vmatpush1.xpose.msra.mxu0 0.0
        %2085 = vmatprep.subr.mxu0 0.0
        %2086 = vmatpush1.xpose.msra.mxu0 0.0
        %2087 = vmatprep.subr.mxu0 0.0
        %2088 = vmatpush1.xpose.msra.mxu0 0.0
        %2089 = vmatprep.subr.mxu0 0.0
        %2090 = vmatpush1.xpose.msra.mxu0 0.0
        %2091 = vmatprep.subr.mxu0 0.0
        %2092 = vmatpush1.xpose.msra.mxu0 0.0
        %2093 = vmatprep.subr.mxu0 0.0
        %2094 = vmatpush1.xpose.msra.mxu0 0.0
        %2095 = vmatprep.subr.mxu0 0.0
        %2096 = vmatpush1.xpose.msra.mxu0 0.0
        %2097 = vmatprep.subr.mxu0 0.0
        %2098 = vmatpush1.xpose.msra.mxu0 0.0
        %2099 = vmatprep.subr.mxu0 0.0
        %2100 = vmatpush1.xpose.msra.mxu0 0.0
        %2101 = vmatprep.subr.mxu0 0.0
        %2102 = vmatpush1.xpose.msra.mxu0 0.0
        %2103 = vmatprep.subr.mxu0 0.0
        %2104 = vmatpush1.xpose.msra.mxu0 0.0
        %2105 = vmatprep.subr.mxu0 0.0
        %2106 = vmatpush1.xpose.msra.mxu0 0.0
        %2107 = vmatprep.subr.mxu0 0.0
        %2108 = vmatpush1.xpose.msra.mxu0 0.0
        %2109 = vmatprep.subr.mxu0 0.0
        %2110 = vmatpush1.xpose.msra.mxu0 0.0
        %2111 = vmatprep.subr.mxu0 0.0
        %2112 = vmatpush1.xpose.msra.mxu0 0.0
        %2113 = vmatprep.subr.mxu0 0.0
        %2114 = vmatpush1.xpose.msra.mxu0 0.0
        %2115 = vmatprep.subr.mxu0 0.0
        %2116 = vmatpush1.xpose.msra.mxu0 0.0
        %2117 = vmatprep.subr.mxu0 0.0
        %2118 = vmatpush1.xpose.msra.mxu0 0.0
        %2119 = vmatprep.subr.mxu0 0.0
        %2120 = vmatpush1.xpose.msra.mxu0 0.0
        %2121 = vmatprep.subr.mxu0 0.0
        %2122 = vmatpush1.xpose.msra.mxu0 0.0
        %2123 = vmatprep.subr.mxu0 0.0
        %2124 = vmatpush1.xpose.msra.mxu0 0.0
        %2125 = vmatprep.mubr.f32.mxu0 0.0
        %2126 = vmatmul.mubr.f32.gmra.mrb[0].mxu0 %v2057
        %v2127 = vpop.f32.mrb[0].mxu0
        %v2128 = vadd.f32 0.0, %v2127
        %v2129 = vpop.f32.mrb[0].mxu0
        %2130 = vdwg.mxu0
        %v2131 = vsel %vm437, %v2128, -inf
        %2132 = vmax.xlane.f32.xlu0 %v2131
        %v2133 = vpop.xlane.xlu0 %2132
        %v2134 = vsub.f32 %v2128, %v2133
        %v2135 = vmul.f32 %v2134, 1.442695
        %v2136 = vpow.pop %v2135
        %v2137 = vsel %vm437, %v2136, 0.0
        %2138 = vadd.xlane.f32.xlu0 %v2137
        %v2139 = vpop.xlane.xlu0 %2138
        %v2140 = vrcp.pop %v2139
        %v2141 = vmul.f32 %v2136, %v2140
        %2142 = vrot.lane.b32.xlu0 %v352, 36
        %v2143 = vpop.permute.xlu0 %2142
        %v2146 = vsel %vm437, %v2141, 0
        %2148 = vmatprep.subr.mxu0 0.0
        %2149 = vmatpush1.msra.mxu0 %v2143
        %2150 = vmatprep.subr.mxu0 0.0
        %2151 = vmatpush1.msra.mxu0 0.0
        %2152 = vmatprep.subr.mxu0 0.0
        %2153 = vmatpush1.msra.mxu0 0.0
        %2154 = vmatprep.subr.mxu0 0.0
        %2155 = vmatpush1.msra.mxu0 0.0
        %2156 = vmatprep.subr.mxu0 0.0
        %2157 = vmatpush1.msra.mxu0 0.0
        %2158 = vmatprep.subr.mxu0 0.0
        %2159 = vmatpush1.msra.mxu0 0.0
        %2160 = vmatprep.subr.mxu0 0.0
        %2161 = vmatpush1.msra.mxu0 0.0
        %2162 = vmatprep.subr.mxu0 0.0
        %2163 = vmatpush1.msra.mxu0 0.0
        %2164 = vmatprep.subr.mxu0 0.0
        %2165 = vmatpush1.msra.mxu0 0.0
        %2166 = vmatprep.subr.mxu0 0.0
        %2167 = vmatpush1.msra.mxu0 0.0
        %2168 = vmatprep.subr.mxu0 0.0
        %2169 = vmatpush1.msra.mxu0 0.0
        %2170 = vmatprep.subr.mxu0 0.0
        %2171 = vmatpush1.msra.mxu0 0.0
        %2172 = vmatprep.subr.mxu0 0.0
        %2173 = vmatpush1.msra.mxu0 0.0
        %2174 = vmatprep.subr.mxu0 0.0
        %2175 = vmatpush1.msra.mxu0 0.0
        %2176 = vmatprep.subr.mxu0 0.0
        %2177 = vmatpush1.msra.mxu0 0.0
        %2178 = vmatprep.subr.mxu0 0.0
        %2179 = vmatpush1.msra.mxu0 0.0
        %2180 = vmatprep.subr.mxu0 0.0
        %2181 = vmatpush1.msra.mxu0 0.0
        %2182 = vmatprep.subr.mxu0 0.0
        %2183 = vmatpush1.msra.mxu0 0.0
        %2184 = vmatprep.subr.mxu0 0.0
        %2185 = vmatpush1.msra.mxu0 0.0
        %2186 = vmatprep.subr.mxu0 0.0
        %2187 = vmatpush1.msra.mxu0 0.0
        %2188 = vmatprep.subr.mxu0 0.0
        %2189 = vmatpush1.msra.mxu0 0.0
        %2190 = vmatprep.subr.mxu0 0.0
        %2191 = vmatpush1.msra.mxu0 0.0
        %2192 = vmatprep.subr.mxu0 0.0
        %2193 = vmatpush1.msra.mxu0 0.0
        %2194 = vmatprep.subr.mxu0 0.0
        %2195 = vmatpush1.msra.mxu0 0.0
        %2196 = vmatprep.subr.mxu0 0.0
        %2197 = vmatpush1.msra.mxu0 0.0
        %2198 = vmatprep.subr.mxu0 0.0
        %2199 = vmatpush1.msra.mxu0 0.0
        %2200 = vmatprep.subr.mxu0 0.0
        %2201 = vmatpush1.msra.mxu0 0.0
        %2202 = vmatprep.subr.mxu0 0.0
        %2203 = vmatpush1.msra.mxu0 0.0
        %2204 = vmatprep.subr.mxu0 0.0
        %2205 = vmatpush1.msra.mxu0 0.0
        %2206 = vmatprep.subr.mxu0 0.0
        %2207 = vmatpush1.msra.mxu0 0.0
        %2208 = vmatprep.subr.mxu0 0.0
        %2209 = vmatpush1.msra.mxu0 0.0
        %2210 = vmatprep.subr.mxu0 0.0
        %2211 = vmatpush1.msra.mxu0 0.0
        %2212 = vmatprep.mubr.f32.mxu0 0.0
        %2213 = vmatmul.mubr.f32.gmra.mrb[0].mxu0 %v2146
        %v2214 = vpop.f32.mrb[0].mxu0
        %v2215 = vadd.f32 0.0, %v2214
        %v2216 = vpop.f32.mrb[0].mxu0
        %2217 = vdwg.mxu0
        %v2218 = vrot.slane %v358, 4
        %v2220 = vsel %vm362, %v2215, 0
        %v2222 = vsel %vm695, %v2218, 0
        %2224 = vmatprep.subr.mxu0 0.0
        %2225 = vmatpush1.msra.mxu0 %v2222
        %2226 = vmatprep.subr.mxu0 0.0
        %2227 = vmatpush1.msra.mxu0 0.0
        %2228 = vmatprep.subr.mxu0 0.0
        %2229 = vmatpush1.msra.mxu0 0.0
        %2230 = vmatprep.subr.mxu0 0.0
        %2231 = vmatpush1.msra.mxu0 0.0
        %2232 = vmatprep.subr.mxu0 0.0
        %2233 = vmatpush1.msra.mxu0 0.0
        %2234 = vmatprep.subr.mxu0 0.0
        %2235 = vmatpush1.msra.mxu0 0.0
        %2236 = vmatprep.subr.mxu0 0.0
        %2237 = vmatpush1.msra.mxu0 0.0
        %2238 = vmatprep.subr.mxu0 0.0
        %2239 = vmatpush1.msra.mxu0 0.0
        %2240 = vmatprep.subr.mxu0 0.0
        %2241 = vmatpush1.msra.mxu0 0.0
        %2242 = vmatprep.subr.mxu0 0.0
        %2243 = vmatpush1.msra.mxu0 0.0
        %2244 = vmatprep.subr.mxu0 0.0
        %2245 = vmatpush1.msra.mxu0 0.0
        %2246 = vmatprep.subr.mxu0 0.0
        %2247 = vmatpush1.msra.mxu0 0.0
        %2248 = vmatprep.subr.mxu0 0.0
        %2249 = vmatpush1.msra.mxu0 0.0
        %2250 = vmatprep.subr.mxu0 0.0
        %2251 = vmatpush1.msra.mxu0 0.0
        %2252 = vmatprep.subr.mxu0 0.0
        %2253 = vmatpush1.msra.mxu0 0.0
        %2254 = vmatprep.subr.mxu0 0.0
        %2255 = vmatpush1.msra.mxu0 0.0
        %2256 = vmatprep.subr.mxu0 0.0
        %2257 = vmatpush1.msra.mxu0 0.0
        %2258 = vmatprep.subr.mxu0 0.0
        %2259 = vmatpush1.msra.mxu0 0.0
        %2260 = vmatprep.subr.mxu0 0.0
        %2261 = vmatpush1.msra.mxu0 0.0
        %2262 = vmatprep.subr.mxu0 0.0
        %2263 = vmatpush1.msra.mxu0 0.0
        %2264 = vmatprep.subr.mxu0 0.0
        %2265 = vmatpush1.msra.mxu0 0.0
        %2266 = vmatprep.subr.mxu0 0.0
        %2267 = vmatpush1.msra.mxu0 0.0
        %2268 = vmatprep.subr.mxu0 0.0
        %2269 = vmatpush1.msra.mxu0 0.0
        %2270 = vmatprep.subr.mxu0 0.0
        %2271 = vmatpush1.msra.mxu0 0.0
        %2272 = vmatprep.subr.mxu0 0.0
        %2273 = vmatpush1.msra.mxu0 0.0
        %2274 = vmatprep.subr.mxu0 0.0
        %2275 = vmatpush1.msra.mxu0 0.0
        %2276 = vmatprep.subr.mxu0 0.0
        %2277 = vmatpush1.msra.mxu0 0.0
        %2278 = vmatprep.subr.mxu0 0.0
        %2279 = vmatpush1.msra.mxu0 0.0
        %2280 = vmatprep.subr.mxu0 0.0
        %2281 = vmatpush1.msra.mxu0 0.0
        %2282 = vmatprep.subr.mxu0 0.0
        %2283 = vmatpush1.msra.mxu0 0.0
        %2284 = vmatprep.subr.mxu0 0.0
        %2285 = vmatpush1.msra.mxu0 0.0
        %2286 = vmatprep.subr.mxu0 0.0
        %2287 = vmatpush1.msra.mxu0 0.0
        %2288 = vmatprep.mubr.f32.mxu0 0.0
        %2289 = vmatmul.mubr.f32.gmra.mrb[0].mxu0 %v2220
        %v2290 = vpop.f32.mrb[0].mxu0
        %v2291 = vadd.f32 0.0, %v2290
        %v2292 = vpop.f32.mrb[0].mxu0
        %2293 = vdwg.mxu0
        %v2294 = vadd.f32 %v2052, %v2291
        %v2295 = vld [vmem:[%s4] sm:$0x1]
        %v2297 = vlaneseq
        %v2298 = vshrl.u32 %v2297, 7
        %v2299 = vsub.s32 0, %v2298
        %v2300 = vrot.slane %v2295, %v2299
        %v2302 = vadd.f32 %v2294, %v2300
        %v2303 = vmax.f32 %v2302, 0.0
        %v2304 = vsel %vm281, %v2303, 0.0
        %2305 = vadd.xlane.f32.xlu0 %v2304
        %v2306 = vpop.xlane.xlu0 %2305
        %v2307 = vrcp.pop 32.0
        %v2308 = vmul.f32 %v2306, %v2307
        %v2309 = vsub.f32 %v2303, %v2308
        %v2310 = vmul.f32 %v2309, %v2309
        %v2311 = vsel %vm281, %v2310, 0.0
        %2312 = vadd.xlane.f32.xlu0 %v2311
        %v2313 = vpop.xlane.xlu0 %2312
        %v2314 = vmul.f32 %v2313, %v2307
        %v2315 = vadd.f32 %v2314, 1e-05
        %v2316 = vrsqrt.pop %v2315
        %v2317 = vmul.f32 %v2309, %v2316
        %2318 = vst.msk [vmem:[%s268] sm:$0xff] %vm281, %v2317
        %s2319 = sand.u32 %s141, 1
        %s2320 = scalar_lea.sflag [#allocation4], %s2319
        %s2321 = sand.u32 %s141, 1
        %s2322 = smul.addr %s2321, 8
        %s2323 = scalar_lea.vmem [#allocation8], %s2322
        // Predicated region
        $region53: #{tpu_custom_call.1} parent=39 // pred_check
          %p2324 = pneg %p151
        $region54: #{tpu_custom_call.1} parent=39 // pred_check_branch
          %2326 = sbr.rel (%p2324) target = $region56
        $region55: #{tpu_custom_call.1} parent=39 // pred_region
          %s2328 = ssub.s32 128, 128
          %2329 = vsyncadd %s2320, %s2328
          %s2330 = smul.addr %s23, 128
          %s2331 = scalar_lea.hbm %s5, %s2330
          %s2333 = sshll.u32 %s2323, 4
          %s2334 = int_to_ptr.vmem [resolvable:$true] %s2333
          %2336 = dma.vmem_to_hbm [thread:$0]  %s2334, 128, %s2331, %s2320
        $region56: #{tpu_custom_call.1} parent=39 // pred_fallthru
          _
      $region40: #{tpu_custom_call.1} parent=5 // pred_fallthru
        _
      %p2337 = scmp.le.s32.totalorder 2, %s18
      // Predicated region
      $region57: #{tpu_custom_call.1} parent=5 // pred_check
        %p2338 = pneg %p2337
      $region58: #{tpu_custom_call.1} parent=5 // pred_check_branch
        %2340 = sbr.rel (%p2338) target = $region60
      $region59: #{tpu_custom_call.1} parent=5 // pred_region
        %s2341 = ssub.s32 %s18, 2
        // Predicated region
        $region61: #{tpu_custom_call.1} parent=59 // pred_check
          %p2342 = pneg %p157
        $region62: #{tpu_custom_call.1} parent=59 // pred_check_branch
          %2344 = sbr.rel (%p2342) target = $region64
        $region63: #{tpu_custom_call.1} parent=59 // pred_region
          %s2345 = sand.u32 %s142, 1
          %s2346 = scalar_lea.sflag [#allocation4], %s2345
          %s2347 = sand.u32 %s142, 1
          %s2348 = smul.addr %s2347, 8
          %s2349 = scalar_lea.vmem [#allocation8], %s2348
          %2350 = dma.done %s2346, 128
        $region64: #{tpu_custom_call.1} parent=59 // pred_fallthru
          _
      $region60: #{tpu_custom_call.1} parent=5 // pred_fallthru
        _
    $region6: #{tpu_custom_call.1} parent=1 // loop_footer
      %s22 = sadd.s32 1, %s18
    $region7: #{tpu_custom_call.1} parent=1 // loop_footer_branch
      %17 = sbr.rel target = $region3
    $region8: #{tpu_custom_call.1} parent=1 // loop_exit
      _
    %2351 = vsyncpa [#allocation3], 1
    %s2352 = scalar_lea.sflag [#allocation3], 1
    %2353 = vsyncpa %s2352, 1
    %2354 = vsyncpa [#allocation6], 1
    %2355 = vsyncpa [#allocation4], 1
    %s2356 = scalar_lea.sflag [#allocation4], 1
    %2357 = vsyncpa %s2356, 1

</llo_original>
